<compile_context>
chip_gen: v5e
topology: v5e:2x2
jax: 0.10.0
libtpu: 0.0.40
codegen_flags: <defaults>
</compile_context>

<pallas_src>
import functools

import jax
import jax.numpy as jnp
from jax.experimental import pallas as pl
from jax.experimental.pallas import tpu as pltpu


# ----------------------------- in-kernel helpers -----------------------------

def _layernorm(x, w, b, eps=1e-5):
    # Fused single-pass stats: E[x], E[x^2] -> one reduction pair over E.
    mu = jnp.mean(x, axis=-1, keepdims=True)
    ms = jnp.mean(x * x, axis=-1, keepdims=True)
    var = ms - mu * mu
    return (x - mu) * jax.lax.rsqrt(var + eps) * w + b


def _gelu_tanh(x):
    # TE / Megatron 'gelu' (tanh approximation), f32 elementwise.
    return 0.5 * x * (1.0 + jnp.tanh(0.7978845608028654 * (x + 0.044715 * x * x * x)))


def _pick_tile(dim, target, align):
    """Largest multiple of `align` <= target that divides dim, else the full dim."""
    t = (min(target, dim) // align) * align
    while t >= align:
        if dim % t == 0:
            return t
        t -= align
    return dim


# --------------------------- hardware-aware sizing ----------------------------

def _vmem_limit_bytes():
    cap = 64 * 1024 * 1024                     # conservative default (v7x per-TC)
    try:
        cap = int(pltpu.get_tpu_info().vmem_capacity_bytes)
    except Exception:
        pass
    # ~3/4 of physical VMEM: 48 MiB on v7x, ~96 MiB on v5e/v6e (capped).
    return int(min((cap * 3) // 4, 100 * 1024 * 1024))


def _n_row_tiles_target():
    # v7x has 2 TensorCores per chip -> want exactly 2 row tiles on the
    # "parallel" axis; v5e/v6e (1 TC) -> a single row tile maximizes weight reuse.
    try:
        kind = jax.devices()[0].device_kind.lower()
        if 'v7' in kind or '7x' in kind:
            return 2
    except Exception:
        pass
    return 1


def _choose_b_tile(B, T, E, vmem_limit, n_row_tiles_target):
    """Largest batch row tile that (roughly) fits the VMEM budget."""
    # Per-layer bf16 weights (3E^2 + E^2 + 4E^2 + 4E^2), double-buffered by BlockSpec.
    weight_bytes = 2 * (12 * E * E) * 2
    budget = int(vmem_limit * 0.8) - weight_bytes
    # Rough per-batch-row activation footprint: residual / x / h / qkv / fc1 / attn
    # copies (~18 E-wide f32 rows) plus one head's live score copies (~3x [T,T] f32).
    per_row = T * E * 4 * 18 + T * T * 4 * 3
    best = 1
    for bt in range(1, B + 1):
        if B % bt:
            continue
        if (B // bt) < n_row_tiles_target:
            break
        if bt * per_row <= budget:
            best = bt
    return best


def _permute_qkv_for_heads(w_qkv, b_qkv, n_heads):
    """Reorder fused-QKV output columns from (which, head, d) to (head, which, d).

    Makes each head's (q|k|v) columns contiguous so the kernel never needs
    head-major concatenates.  w_proj needs no permutation (its input rows are
    already grouped per head).  Done once in the wrapper, never in-kernel.
    """
    L, E, threeE = w_qkv.shape
    dh = E // n_heads
    w = w_qkv.reshape(L, E, 3, n_heads, dh).transpose(0, 1, 3, 2, 4).reshape(L, E, threeE)
    b = b_qkv.reshape(L, 1, 3, n_heads, dh).transpose(0, 1, 3, 2, 4).reshape(L, 1, threeE)
    return w, b


# --------------------------- transformer stack kernel ------------------------

def gpt_block_kernel(x_ref,
                     ln1w_ref, ln1b_ref, wqkv_ref, bqkv_ref, wproj_ref, bproj_ref,
                     ln2w_ref, ln2b_ref, wfc1_ref, bfc1_ref, wfc2_ref, bfc2_ref,
                     lnfw_ref, lnfb_ref,
                     out_ref, res_scr, attn_scr, *, n_heads):
    layer = pl.program_id(1)
    n_layers = pl.num_programs(1)

    @pl.when(layer == 0)
    def _init():
        # f32 residual stream lives in VMEM scratch for this row tile.
        res_scr[...] = x_ref[...]

    x = res_scr[...]                              # [Bt, T, E] f32 residual stream
    Bt, T, E = x.shape
    dh = E // n_heads
    N = Bt * T
    x2 = x.reshape(N, E)

    # Causal predicate (shared across heads) -- cheap iota compares, no scratch.
    rowi = jax.lax.broadcasted_iota(jnp.int32, (T, T), 0)
    coli = jax.lax.broadcasted_iota(jnp.int32, (T, T), 1)
    causal = (coli > rowi)[None]                  # [1, T, T] bool

    # ---- self-attention sub-block: pre-LN, per-head fused QKV, causal, out-proj ----
    h = _layernorm(x2, ln1w_ref[...], ln1b_ref[...]).astype(jnp.bfloat16)
    bqkv = bqkv_ref[...]                          # [1, 3E] f32 (head-permuted)
    scale = 1.0 / (dh ** 0.5)

    for hd in range(n_heads):
        # Head hd's (q|k|v) columns are contiguous thanks to the pre-permutation.
        w_h = wqkv_ref[:, hd * 3 * dh:(hd + 1) * 3 * dh]           # [E, 3*dh] bf16
        b_h = bqkv[:, hd * 3 * dh:(hd + 1) * 3 * dh]               # [1, 3*dh] f32
        qkv = jnp.dot(h, w_h, preferred_element_type=jnp.float32) + b_h   # [N, 3*dh]
        q = (qkv[:, 0 * dh:1 * dh] * scale).reshape(Bt, T, dh).astype(jnp.bfloat16)
        k = qkv[:, 1 * dh:2 * dh].reshape(Bt, T, dh).astype(jnp.bfloat16)
        v = qkv[:, 2 * dh:3 * dh].reshape(Bt, T, dh).astype(jnp.bfloat16)

        s = jnp.einsum('bqd,bkd->bqk', q, k,
                       preferred_element_type=jnp.float32)          # [Bt, T, T] f32
        s = jnp.where(causal, -1e30, s)
        s = s - jnp.max(s, axis=-1, keepdims=True)
        p = jnp.exp(s)
        l = jnp.sum(p, axis=-1, keepdims=True)
        o = jnp.einsum('bqk,bkd->bqd', p.astype(jnp.bfloat16), v,
                       preferred_element_type=jnp.float32)           # [Bt, T, dh]
        # Normalize AFTER PV: divide the small [Bt,T,dh] output, not the [Bt,T,T] probs.
        o = o * pl.reciprocal(l, approx=True)
        attn_scr[:, hd * dh:(hd + 1) * dh] = o.reshape(N, dh).astype(jnp.bfloat16)

    attn = jnp.dot(attn_scr[...], wproj_ref[...],
                   preferred_element_type=jnp.float32) + bproj_ref[...]
    x2 = x2 + attn                                 # residual (f32)

    # ---- MLP sub-block: pre-LN, fc1 -> gelu -> fc2 ----
    h = _layernorm(x2, ln2w_ref[...], ln2b_ref[...]).astype(jnp.bfloat16)
    h = jnp.dot(h, wfc1_ref[...], preferred_element_type=jnp.float32) + bfc1_ref[...]
    h = _gelu_tanh(h).astype(jnp.bfloat16)
    h = jnp.dot(h, wfc2_ref[...], preferred_element_type=jnp.float32) + bfc2_ref[...]
    x2 = x2 + h                                    # residual (f32)

    @pl.when(layer < n_layers - 1)
    def _carry():
        res_scr[...] = x2.reshape(Bt, T, E)

    @pl.when(layer == n_layers - 1)
    def _finalize():
        # Fold the final out_norm LayerNorm into the last layer's epilogue;
        # write back bf16 (halves HBM writeback + lm_head input read).
        out_ref[...] = _layernorm(x2, lnfw_ref[...], lnfb_ref[...]) \
            .reshape(Bt, T, E).astype(out_ref.dtype)


def run_blocks(x, p, *, n_heads, vmem_limit=None, b_tile=None):
    B, T, E = x.shape
    L = p['ln1_w'].shape[0]
    if vmem_limit is None:
        vmem_limit = _vmem_limit_bytes()
    if b_tile is None:
        b_tile = _choose_b_tile(B, T, E, vmem_limit, _n_row_tiles_target())
    assert B % b_tile == 0
    grid = (B // b_tile, L)

    # One-time column permutation of the fused QKV weights (wrapper-side, not in-kernel).
    w_qkv, b_qkv = _permute_qkv_for_heads(p['w_qkv'], p['b_qkv'], n_heads)

    def xmap(b, l):
        return (b, 0, 0)

    def wmap(b, l):
        return (l, 0, 0)

    def cmap(b, l):
        return (0, 0)

    grid_spec = pltpu.PrefetchScalarGridSpec(
        num_scalar_prefetch=0,
        grid=grid,
        in_specs=[
            pl.BlockSpec((b_tile, T, E), xmap),              # x0 (f32 embeddings)
            pl.BlockSpec((None, 1, E), wmap),                # ln1 w
            pl.BlockSpec((None, 1, E), wmap),                # ln1 b
            pl.BlockSpec((None, E, 3 * E), wmap),            # w_qkv  [in, out] bf16 (head-permuted)
            pl.BlockSpec((None, 1, 3 * E), wmap),            # b_qkv  (head-permuted)
            pl.BlockSpec((None, E, E), wmap),                # w_proj [in, out] bf16
            pl.BlockSpec((None, 1, E), wmap),                # b_proj
            pl.BlockSpec((None, 1, E), wmap),                # ln2 w
            pl.BlockSpec((None, 1, E), wmap),                # ln2 b
            pl.BlockSpec((None, E, 4 * E), wmap),            # w_fc1 [in, out] bf16
            pl.BlockSpec((None, 1, 4 * E), wmap),            # b_fc1
            pl.BlockSpec((None, 4 * E, E), wmap),            # w_fc2 [in, out] bf16
            pl.BlockSpec((None, 1, E), wmap),                # b_fc2
            pl.BlockSpec((1, E), cmap),                      # out_norm w
            pl.BlockSpec((1, E), cmap),                      # out_norm b
        ],
        out_specs=pl.BlockSpec((b_tile, T, E), xmap),        # written only at the last layer
        scratch_shapes=[
            pltpu.VMEM((b_tile, T, E), jnp.float32),         # carried residual stream
            pltpu.VMEM((b_tile * T, E), jnp.bfloat16),       # per-head attention outputs
        ],
    )
    return pl.pallas_call(
        functools.partial(gpt_block_kernel, n_heads=n_heads),
        out_shape=jax.ShapeDtypeStruct((B, T, E), jnp.bfloat16),
        grid_spec=grid_spec,
        compiler_params=pltpu.CompilerParams(
            dimension_semantics=("parallel", "arbitrary"),
            vmem_limit_bytes=vmem_limit),
    )(x, p['ln1_w'], p['ln1_b'], w_qkv, b_qkv, p['w_proj'], p['b_proj'],
      p['ln2_w'], p['ln2_b'], p['w_fc1'], p['b_fc1'], p['w_fc2'], p['b_fc2'],
      p['out_w'], p['out_b'])


# --------------------------- tied-embedding LM head ---------------------------

def lm_head_kernel(x_ref, wtok_ref, out_ref):
    # x_ref: [tn, E] bf16 (already out_norm'ed), wtok_ref: [tv, E] bf16.
    # Contract the last dim of both operands -> no transpose of the vocab table.
    out_ref[...] = jax.lax.dot_general(
        x_ref[...], wtok_ref[...],
        dimension_numbers=(((1,), (1,)), ((), ())),
        preferred_element_type=jnp.float32)


def run_lm_head(x2d, w_tok, *, vmem_limit=None):
    N, E = x2d.shape
    V = w_tok.shape[0]
    if vmem_limit is None:
        vmem_limit = _vmem_limit_bytes()

    tn = _pick_tile(N, 256, 8)
    tv_target = 2048
    tv = _pick_tile(V, tv_target, 256)             # 256-aligned for the v6e/v7x MXU

    def est(tn_, tv_):                             # double-buffered block footprint
        return 2 * (tn_ * E * 2 + tv_ * E * 2 + tn_ * tv_ * 4)

    while tv_target > 256 and est(tn, tv) > int(vmem_limit * 0.8):
        tv_target //= 2
        tv = _pick_tile(V, tv_target, 256)

    # Vocab tiles on the OUTER (slow) axis, row tiles inner-fast: the [tv, E]
    # vocab block stays resident while the small x tiles stream, so the vocab
    # table is read from HBM exactly once per sweep.
    grid = (V // tv, N // tn)
    return pl.pallas_call(
        lm_head_kernel,
        out_shape=jax.ShapeDtypeStruct((N, V), jnp.float32),
        grid_spec=pltpu.PrefetchScalarGridSpec(
            num_scalar_prefetch=0,
            grid=grid,
            in_specs=[pl.BlockSpec((tn, E), lambda j, i: (i, 0)),
                      pl.BlockSpec((tv, E), lambda j, i: (j, 0))],
            out_specs=pl.BlockSpec((tn, tv), lambda j, i: (i, j)),
        ),
        compiler_params=pltpu.CompilerParams(
            dimension_semantics=("parallel", "parallel"),
            vmem_limit_bytes=vmem_limit),
    )(x2d, w_tok)


# ------------------------------- model wrapper --------------------------------

def fp8_gpt_forward(idx_BT, params, *, n_heads, is_first_microbatch=True):
    del is_first_microbatch   # fp8 weight-caching flag: no effect on bf16/f32 math
    B, T = idx_BT.shape
    E = params['w_tok'].shape[1]
    vmem_limit = _vmem_limit_bytes()
    # embeddings (gather) — glue in plain JAX
    tok = jnp.take(params['w_tok'], idx_BT, axis=0).astype(jnp.float32)   # [B, T, E]
    pos = params['w_pos'][:T].astype(jnp.float32)[None]                   # [1, T, E]
    x = tok + pos
    x = run_blocks(x, params, n_heads=n_heads, vmem_limit=vmem_limit)     # bf16 [B,T,E]
    logits = run_lm_head(x.reshape(B * T, E), params['w_tok'], vmem_limit=vmem_limit)
    return logits.reshape(B, T, -1)


# ------------------------------ parameter init --------------------------------

def init_params(key, *, vocab, max_seq, n_layers, d_embd):
    E, L = d_embd, n_layers
    ks = jax.random.split(key, 8)
    std = 0.02

    def nrm(k, shape):
        # master storage in bf16 (halves weight DMA traffic; MXU-native operand)
        return (std * jax.random.normal(k, shape, dtype=jnp.float32)).astype(jnp.bfloat16)

    return {
        'w_tok': nrm(ks[0], (vocab, E)),
        'w_pos': nrm(ks[1], (max_seq, E)),
        # projection weights stored pre-transposed: [layer, in, out]
        'ln1_w': jnp.ones((L, 1, E), jnp.float32),
        'ln1_b': jnp.zeros((L, 1, E), jnp.float32),
        'w_qkv': nrm(ks[2], (L, E, 3 * E)),
        'b_qkv': jnp.zeros((L, 1, 3 * E), jnp.float32),
        'w_proj': nrm(ks[3], (L, E, E)),
        'b_proj': jnp.zeros((L, 1, E), jnp.float32),
        'ln2_w': jnp.ones((L, 1, E), jnp.float32),
        'ln2_b': jnp.zeros((L, 1, E), jnp.float32),
        'w_fc1': nrm(ks[4], (L, E, 4 * E)),
        'b_fc1': jnp.zeros((L, 1, 4 * E), jnp.float32),
        'w_fc2': nrm(ks[5], (L, 4 * E, E)),
        'b_fc2': jnp.zeros((L, 1, E), jnp.float32),
        'out_w': jnp.ones((1, E), jnp.float32),
        'out_b': jnp.zeros((1, E), jnp.float32),
    }


# ------------------------------ pure-JAX reference -----------------------------

def reference_forward(idx_BT, p, *, n_heads):
    B, T = idx_BT.shape
    E = p['w_tok'].shape[1]
    dh = E // n_heads
    wt = p['w_tok'].astype(jnp.float32)
    x = jnp.take(wt, idx_BT, axis=0) + p['w_pos'][:T].astype(jnp.float32)[None]
    L = p['ln1_w'].shape[0]
    row = jnp.arange(T)[:, None]
    col = jnp.arange(T)[None, :]
    bias = jnp.where(col > row, -1e30, 0.0)
    for l in range(L):
        h = _layernorm(x, p['ln1_w'][l], p['ln1_b'][l])
        qkv = h @ p['w_qkv'][l].astype(jnp.float32) + p['b_qkv'][l]
        q, k, v = qkv[..., :E], qkv[..., E:2 * E], qkv[..., 2 * E:]
        q = q.reshape(B, T, n_heads, dh)
        k = k.reshape(B, T, n_heads, dh)
        v = v.reshape(B, T, n_heads, dh)
        s = jnp.einsum('bqhd,bkhd->bhqk', q, k) / (dh ** 0.5) + bias
        pr = jax.nn.softmax(s, axis=-1)
        a = jnp.einsum('bhqk,bkhd->bqhd', pr, v).reshape(B, T, E)
        x = x + a @ p['w_proj'][l].astype(jnp.float32) + p['b_proj'][l]
        h = _layernorm(x, p['ln2_w'][l], p['ln2_b'][l])
        h = _gelu_tanh(h @ p['w_fc1'][l].astype(jnp.float32) + p['b_fc1'][l])
        x = x + h @ p['w_fc2'][l].astype(jnp.float32) + p['b_fc2'][l]
    x = _layernorm(x, p['out_w'], p['out_b'])
    return x @ wt.T


# ------------------------------------ main -------------------------------------

if __name__ == "__main__":
    VOCAB, MAX_SEQ, N_LAYERS, D_EMBD, N_HEADS = 64, 16, 2, 32, 4
    B, T = 2, 8

    key = jax.random.PRNGKey(0)
    pkey, ikey = jax.random.split(key)
    params = init_params(pkey, vocab=VOCAB, max_seq=MAX_SEQ,
                         n_layers=N_LAYERS, d_embd=D_EMBD)
    idx_BT = jax.random.randint(ikey, (B, T), 0, VOCAB, dtype=jnp.int32)

    logits = fp8_gpt_forward(idx_BT, params, n_heads=N_HEADS,
                             is_first_microbatch=True)
    logits = jax.block_until_ready(logits)

    ref = reference_forward(idx_BT, params, n_heads=N_HEADS)
    assert logits.shape == (B, T, VOCAB)
    max_err = jnp.max(jnp.abs(logits - ref))
    assert jnp.allclose(logits, ref, atol=2e-2, rtol=2e-2), f"max abs err {max_err}"

    print("KERNEL_OK")
</pallas_src>

<mosaic_0001>
module attributes {stable_mosaic.version = 11 : i64} {
  func.func @gpt_block_kernel(%arg0: i32, %arg1: i32, %arg2: memref<2x8x32xf32, #tpu.memory_space<vmem>>, %arg3: memref<1x1x32xf32, #tpu.memory_space<vmem>>, %arg4: memref<1x1x32xf32, #tpu.memory_space<vmem>>, %arg5: memref<1x32x96xbf16, #tpu.memory_space<vmem>>, %arg6: memref<1x1x96xf32, #tpu.memory_space<vmem>>, %arg7: memref<1x32x32xbf16, #tpu.memory_space<vmem>>, %arg8: memref<1x1x32xf32, #tpu.memory_space<vmem>>, %arg9: memref<1x1x32xf32, #tpu.memory_space<vmem>>, %arg10: memref<1x1x32xf32, #tpu.memory_space<vmem>>, %arg11: memref<1x32x128xbf16, #tpu.memory_space<vmem>>, %arg12: memref<1x1x128xf32, #tpu.memory_space<vmem>>, %arg13: memref<1x128x32xbf16, #tpu.memory_space<vmem>>, %arg14: memref<1x1x32xf32, #tpu.memory_space<vmem>>, %arg15: memref<1x32xf32, #tpu.memory_space<vmem>>, %arg16: memref<1x32xf32, #tpu.memory_space<vmem>>, %arg17: memref<2x8x32xbf16, #tpu.memory_space<vmem>>, %arg18: memref<2x8x32xf32, #tpu.memory_space<vmem>>, %arg19: memref<16x32xbf16, #tpu.memory_space<vmem>>) attributes {dimension_semantics = [#tpu.dimension_semantics<parallel>, #tpu.dimension_semantics<arbitrary>], iteration_bounds = array<i64: 1, 2>, scalar_prefetch = 0 : i64, scratch_operands = 2 : i64, tpu.core_type = #tpu.core_type<tc>, window_params = [{transform_indices = @transform_0, window_bounds = array<i64: 2, 8, 32>}, {transform_indices = @transform_1, window_bounds = array<i64: 1, 1, 32>}, {transform_indices = @transform_2, window_bounds = array<i64: 1, 1, 32>}, {transform_indices = @transform_3, window_bounds = array<i64: 1, 32, 96>}, {transform_indices = @transform_4, window_bounds = array<i64: 1, 1, 96>}, {transform_indices = @transform_5, window_bounds = array<i64: 1, 32, 32>}, {transform_indices = @transform_6, window_bounds = array<i64: 1, 1, 32>}, {transform_indices = @transform_7, window_bounds = array<i64: 1, 1, 32>}, {transform_indices = @transform_8, window_bounds = array<i64: 1, 1, 32>}, {transform_indices = @transform_9, window_bounds = array<i64: 1, 32, 128>}, {transform_indices = @transform_10, window_bounds = array<i64: 1, 1, 128>}, {transform_indices = @transform_11, window_bounds = array<i64: 1, 128, 32>}, {transform_indices = @transform_12, window_bounds = array<i64: 1, 1, 32>}, {pipeline_mode = #tpu.pipeline_mode<synchronous>, transform_indices = @transform_13, window_bounds = array<i64: 1, 32>}, {pipeline_mode = #tpu.pipeline_mode<synchronous>, transform_indices = @transform_14, window_bounds = array<i64: 1, 32>}, {transform_indices = @transform_15, window_bounds = array<i64: 2, 8, 32>}]} {
    %c0_i32 = arith.constant 0 : i32
    %0 = arith.cmpi eq, %arg1, %c0_i32 : i32
    %1 = arith.extui %0 : i1 to i32
    %c0_i32_0 = arith.constant 0 : i32
    %2 = arith.cmpi ne, %1, %c0_i32_0 : i32
    scf.if %2 {
      %c0_100 = arith.constant 0 : index
      %c0_101 = arith.constant 0 : index
      %c0_102 = arith.constant 0 : index
      %257 = vector.load %arg2[%c0_100, %c0_101, %c0_102] : memref<2x8x32xf32, #tpu.memory_space<vmem>>, vector<2x8x32xf32>
      %c0_103 = arith.constant 0 : index
      %c0_104 = arith.constant 0 : index
      %c0_105 = arith.constant 0 : index
      %258 = vector.load %arg18[%c0_103, %c0_104, %c0_105] : memref<2x8x32xf32, #tpu.memory_space<vmem>>, vector<2x8x32xf32>
      tpu.vector_store %arg18[%c0_103, %c0_104, %c0_105], %257 {strides = array<i32>} : memref<2x8x32xf32, #tpu.memory_space<vmem>>, vector<2x8x32xf32>,
    } else {
    }
    %c0 = arith.constant 0 : index
    %c0_1 = arith.constant 0 : index
    %c0_2 = arith.constant 0 : index
    %3 = vector.load %arg18[%c0, %c0_1, %c0_2] : memref<2x8x32xf32, #tpu.memory_space<vmem>>, vector<2x8x32xf32>
    %4 = vector.shape_cast %3 : vector<2x8x32xf32> to vector<16x32xf32>
    %5 = tpu.iota {dimensions = array<i32: 0>} : vector<8x8xi32>
    %6 = tpu.iota {dimensions = array<i32: 1>} : vector<8x8xi32>
    %7 = arith.cmpi sgt, %6, %5 : vector<8x8xi32>
    %8 = vector.shape_cast %7 : vector<8x8xi1> to vector<1x8x8xi1>
    %c0_3 = arith.constant 0 : index
    %c0_4 = arith.constant 0 : index
    %c0_5 = arith.constant 0 : index
    %9 = vector.load %arg3[%c0_3, %c0_4, %c0_5] : memref<1x1x32xf32, #tpu.memory_space<vmem>>, vector<1x1x32xf32>
    %10 = vector.shape_cast %9 : vector<1x1x32xf32> to vector<1x32xf32>
    %c0_6 = arith.constant 0 : index
    %c0_7 = arith.constant 0 : index
    %c0_8 = arith.constant 0 : index
    %11 = vector.load %arg4[%c0_6, %c0_7, %c0_8] : memref<1x1x32xf32, #tpu.memory_space<vmem>>, vector<1x1x32xf32>
    %12 = vector.shape_cast %11 : vector<1x1x32xf32> to vector<1x32xf32>
    %cst = arith.constant dense<0.000000e+00> : vector<16xf32>
    %13 = vector.multi_reduction <add>, %4, %cst [1] : vector<16x32xf32> to vector<16xf32>
    %14 = vector.shape_cast %13 : vector<16xf32> to vector<16x1xf32>
    %cst_9 = arith.constant 3.200000e+01 : f32
    %15 = vector.broadcast %cst_9 : f32 to vector<16x1xf32>
    %16 = arith.divf %14, %15 : vector<16x1xf32>
    %17 = arith.mulf %4, %4 : vector<16x32xf32>
    %cst_10 = arith.constant dense<0.000000e+00> : vector<16xf32>
    %18 = vector.multi_reduction <add>, %17, %cst_10 [1] : vector<16x32xf32> to vector<16xf32>
    %19 = vector.shape_cast %18 : vector<16xf32> to vector<16x1xf32>
    %cst_11 = arith.constant 3.200000e+01 : f32
    %20 = vector.broadcast %cst_11 : f32 to vector<16x1xf32>
    %21 = arith.divf %19, %20 : vector<16x1xf32>
    %22 = arith.mulf %16, %16 : vector<16x1xf32>
    %23 = arith.subf %21, %22 : vector<16x1xf32>
    %24 = vector.broadcast %16 : vector<16x1xf32> to vector<16x32xf32>
    %25 = arith.subf %4, %24 : vector<16x32xf32>
    %cst_12 = arith.constant 9.99999974E-6 : f32
    %26 = vector.broadcast %cst_12 : f32 to vector<16x1xf32>
    %27 = arith.addf %23, %26 : vector<16x1xf32>
    %28 = math.rsqrt %27 : vector<16x1xf32>
    %29 = vector.broadcast %28 : vector<16x1xf32> to vector<16x32xf32>
    %30 = arith.mulf %25, %29 : vector<16x32xf32>
    %31 = vector.broadcast %10 : vector<1x32xf32> to vector<16x32xf32>
    %32 = arith.mulf %30, %31 : vector<16x32xf32>
    %33 = vector.broadcast %12 : vector<1x32xf32> to vector<16x32xf32>
    %34 = arith.addf %32, %33 : vector<16x32xf32>
    %35 = arith.truncf %34 : vector<16x32xf32> to vector<16x32xbf16>
    %c0_13 = arith.constant 0 : index
    %c0_14 = arith.constant 0 : index
    %c0_15 = arith.constant 0 : index
    %36 = vector.load %arg6[%c0_13, %c0_14, %c0_15] : memref<1x1x96xf32, #tpu.memory_space<vmem>>, vector<1x1x96xf32>
    %37 = vector.shape_cast %36 : vector<1x1x96xf32> to vector<1x96xf32>
    %c0_16 = arith.constant 0 : index
    %c0_17 = arith.constant 0 : index
    %c0_18 = arith.constant 0 : index
    %38 = vector.load %arg5[%c0_16, %c0_17, %c0_18] : memref<1x32x96xbf16, #tpu.memory_space<vmem>>, vector<1x32x24xbf16>
    %39 = vector.shape_cast %38 : vector<1x32x24xbf16> to vector<32x24xbf16>
    %40 = vector.extract_strided_slice %37 {offsets = [0, 0], sizes = [1, 24], strides = [1, 1]} : vector<1x96xf32> to vector<1x24xf32>
    %cst_19 = arith.constant dense<0.000000e+00> : vector<16x24xf32>
    %41 = tpu.matmul %35, %39, %cst_19 {dimension_numbers = #tpu.dot_dimension_numbers<[1], [0], [0], [1], [0, 0, 1, 1], [], []>} : vector<16x32xbf16>, vector<32x24xbf16>, vector<16x24xf32> -> vector<16x24xf32>
    %42 = vector.broadcast %40 : vector<1x24xf32> to vector<16x24xf32>
    %43 = arith.addf %41, %42 : vector<16x24xf32>
    %44 = vector.extract_strided_slice %43 {offsets = [0, 0], sizes = [16, 8], strides = [1, 1]} : vector<16x24xf32> to vector<16x8xf32>
    %cst_20 = arith.constant 0.353553385 : f32
    %45 = vector.broadcast %cst_20 : f32 to vector<16x8xf32>
    %46 = arith.mulf %44, %45 : vector<16x8xf32>
    %47 = vector.shape_cast %46 : vector<16x8xf32> to vector<2x8x8xf32>
    %48 = arith.truncf %47 : vector<2x8x8xf32> to vector<2x8x8xbf16>
    %49 = vector.extract_strided_slice %43 {offsets = [0, 8], sizes = [16, 8], strides = [1, 1]} : vector<16x24xf32> to vector<16x8xf32>
    %50 = vector.shape_cast %49 : vector<16x8xf32> to vector<2x8x8xf32>
    %51 = arith.truncf %50 : vector<2x8x8xf32> to vector<2x8x8xbf16>
    %52 = vector.extract_strided_slice %43 {offsets = [0, 16], sizes = [16, 8], strides = [1, 1]} : vector<16x24xf32> to vector<16x8xf32>
    %53 = vector.shape_cast %52 : vector<16x8xf32> to vector<2x8x8xf32>
    %54 = arith.truncf %53 : vector<2x8x8xf32> to vector<2x8x8xbf16>
    "tpu.trace_start"() <{level = 10 : i32, message = "bqd,bkd->bqk"}> : () -> ()
    %cst_21 = arith.constant dense<0.000000e+00> : vector<2x8x8xf32>
    %55 = tpu.matmul %48, %51, %cst_21 {dimension_numbers = #tpu.dot_dimension_numbers<[2], [2], [1], [1], [0, 0, 0, 1, 1, 1], [0], [0]>} : vector<2x8x8xbf16>, vector<2x8x8xbf16>, vector<2x8x8xf32> -> vector<2x8x8xf32>
    %cst_22 = arith.constant -1.000000e+30 : f32
    "tpu.trace_stop"() : () -> ()
    %56 = vector.shape_cast %8 : vector<1x8x8xi1> to vector<1x8x8xi1>
    %57 = vector.broadcast %56 : vector<1x8x8xi1> to vector<2x8x8xi1>
    %58 = vector.broadcast %cst_22 : f32 to vector<2x8x8xf32>
    %59 = arith.select %57, %58, %55 : vector<2x8x8xi1>, vector<2x8x8xf32>
    %cst_23 = arith.constant dense<0xFF800000> : vector<2x8xf32>
    %60 = vector.multi_reduction <maximumf>, %59, %cst_23 [2] : vector<2x8x8xf32> to vector<2x8xf32>
    %61 = vector.shape_cast %60 : vector<2x8xf32> to vector<2x8x1xf32>
    %62 = vector.broadcast %61 : vector<2x8x1xf32> to vector<2x8x8xf32>
    %63 = arith.subf %59, %62 : vector<2x8x8xf32>
    %64 = math.exp %63 : vector<2x8x8xf32>
    %cst_24 = arith.constant dense<0.000000e+00> : vector<2x8xf32>
    %65 = vector.multi_reduction <add>, %64, %cst_24 [2] : vector<2x8x8xf32> to vector<2x8xf32>
    %66 = vector.shape_cast %65 : vector<2x8xf32> to vector<2x8x1xf32>
    %67 = arith.truncf %64 : vector<2x8x8xf32> to vector<2x8x8xbf16>
    "tpu.trace_start"() <{level = 10 : i32, message = "bqk,bkd->bqd"}> : () -> ()
    %cst_25 = arith.constant dense<0.000000e+00> : vector<2x8x8xf32>
    %68 = tpu.matmul %67, %54, %cst_25 {dimension_numbers = #tpu.dot_dimension_numbers<[2], [1], [1], [2], [0, 0, 0, 1, 1, 2], [0], [0]>} : vector<2x8x8xbf16>, vector<2x8x8xbf16>, vector<2x8x8xf32> -> vector<2x8x8xf32>
    "tpu.trace_stop"() : () -> ()
    %69 = tpu.reciprocal %66 {approx = true} : vector<2x8x1xf32> -> vector<2x8x1xf32>
    %70 = vector.broadcast %69 : vector<2x8x1xf32> to vector<2x8x8xf32>
    %71 = arith.mulf %68, %70 : vector<2x8x8xf32>
    %72 = vector.shape_cast %71 : vector<2x8x8xf32> to vector<16x8xf32>
    %73 = arith.truncf %72 : vector<16x8xf32> to vector<16x8xbf16>
    %c0_26 = arith.constant 0 : index
    %c0_27 = arith.constant 0 : index
    %74 = vector.load %arg19[%c0_26, %c0_27] : memref<16x32xbf16, #tpu.memory_space<vmem>>, vector<16x8xbf16>
    tpu.vector_store %arg19[%c0_26, %c0_27], %73 {strides = array<i32>} : memref<16x32xbf16, #tpu.memory_space<vmem>>, vector<16x8xbf16>,
    %c0_28 = arith.constant 0 : index
    %c0_29 = arith.constant 0 : index
    %c24 = arith.constant 24 : index
    %75 = vector.load %arg5[%c0_28, %c0_29, %c24] : memref<1x32x96xbf16, #tpu.memory_space<vmem>>, vector<1x32x24xbf16>
    %76 = vector.shape_cast %75 : vector<1x32x24xbf16> to vector<32x24xbf16>
    %77 = vector.extract_strided_slice %37 {offsets = [0, 24], sizes = [1, 24], strides = [1, 1]} : vector<1x96xf32> to vector<1x24xf32>
    %cst_30 = arith.constant dense<0.000000e+00> : vector<16x24xf32>
    %78 = tpu.matmul %35, %76, %cst_30 {dimension_numbers = #tpu.dot_dimension_numbers<[1], [0], [0], [1], [0, 0, 1, 1], [], []>} : vector<16x32xbf16>, vector<32x24xbf16>, vector<16x24xf32> -> vector<16x24xf32>
    %79 = vector.broadcast %77 : vector<1x24xf32> to vector<16x24xf32>
    %80 = arith.addf %78, %79 : vector<16x24xf32>
    %81 = vector.extract_strided_slice %80 {offsets = [0, 0], sizes = [16, 8], strides = [1, 1]} : vector<16x24xf32> to vector<16x8xf32>
    %cst_31 = arith.constant 0.353553385 : f32
    %82 = vector.broadcast %cst_31 : f32 to vector<16x8xf32>
    %83 = arith.mulf %81, %82 : vector<16x8xf32>
    %84 = vector.shape_cast %83 : vector<16x8xf32> to vector<2x8x8xf32>
    %85 = arith.truncf %84 : vector<2x8x8xf32> to vector<2x8x8xbf16>
    %86 = vector.extract_strided_slice %80 {offsets = [0, 8], sizes = [16, 8], strides = [1, 1]} : vector<16x24xf32> to vector<16x8xf32>
    %87 = vector.shape_cast %86 : vector<16x8xf32> to vector<2x8x8xf32>
    %88 = arith.truncf %87 : vector<2x8x8xf32> to vector<2x8x8xbf16>
    %89 = vector.extract_strided_slice %80 {offsets = [0, 16], sizes = [16, 8], strides = [1, 1]} : vector<16x24xf32> to vector<16x8xf32>
    %90 = vector.shape_cast %89 : vector<16x8xf32> to vector<2x8x8xf32>
    %91 = arith.truncf %90 : vector<2x8x8xf32> to vector<2x8x8xbf16>
    "tpu.trace_start"() <{level = 10 : i32, message = "bqd,bkd->bqk"}> : () -> ()
    %cst_32 = arith.constant dense<0.000000e+00> : vector<2x8x8xf32>
    %92 = tpu.matmul %85, %88, %cst_32 {dimension_numbers = #tpu.dot_dimension_numbers<[2], [2], [1], [1], [0, 0, 0, 1, 1, 1], [0], [0]>} : vector<2x8x8xbf16>, vector<2x8x8xbf16>, vector<2x8x8xf32> -> vector<2x8x8xf32>
    %cst_33 = arith.constant -1.000000e+30 : f32
    "tpu.trace_stop"() : () -> ()
    %93 = vector.shape_cast %8 : vector<1x8x8xi1> to vector<1x8x8xi1>
    %94 = vector.broadcast %93 : vector<1x8x8xi1> to vector<2x8x8xi1>
    %95 = vector.broadcast %cst_33 : f32 to vector<2x8x8xf32>
    %96 = arith.select %94, %95, %92 : vector<2x8x8xi1>, vector<2x8x8xf32>
    %cst_34 = arith.constant dense<0xFF800000> : vector<2x8xf32>
    %97 = vector.multi_reduction <maximumf>, %96, %cst_34 [2] : vector<2x8x8xf32> to vector<2x8xf32>
    %98 = vector.shape_cast %97 : vector<2x8xf32> to vector<2x8x1xf32>
    %99 = vector.broadcast %98 : vector<2x8x1xf32> to vector<2x8x8xf32>
    %100 = arith.subf %96, %99 : vector<2x8x8xf32>
    %101 = math.exp %100 : vector<2x8x8xf32>
    %cst_35 = arith.constant dense<0.000000e+00> : vector<2x8xf32>
    %102 = vector.multi_reduction <add>, %101, %cst_35 [2] : vector<2x8x8xf32> to vector<2x8xf32>
    %103 = vector.shape_cast %102 : vector<2x8xf32> to vector<2x8x1xf32>
    %104 = arith.truncf %101 : vector<2x8x8xf32> to vector<2x8x8xbf16>
    "tpu.trace_start"() <{level = 10 : i32, message = "bqk,bkd->bqd"}> : () -> ()
    %cst_36 = arith.constant dense<0.000000e+00> : vector<2x8x8xf32>
    %105 = tpu.matmul %104, %91, %cst_36 {dimension_numbers = #tpu.dot_dimension_numbers<[2], [1], [1], [2], [0, 0, 0, 1, 1, 2], [0], [0]>} : vector<2x8x8xbf16>, vector<2x8x8xbf16>, vector<2x8x8xf32> -> vector<2x8x8xf32>
    "tpu.trace_stop"() : () -> ()
    %106 = tpu.reciprocal %103 {approx = true} : vector<2x8x1xf32> -> vector<2x8x1xf32>
    %107 = vector.broadcast %106 : vector<2x8x1xf32> to vector<2x8x8xf32>
    %108 = arith.mulf %105, %107 : vector<2x8x8xf32>
    %109 = vector.shape_cast %108 : vector<2x8x8xf32> to vector<16x8xf32>
    %110 = arith.truncf %109 : vector<16x8xf32> to vector<16x8xbf16>
    %c0_37 = arith.constant 0 : index
    %c8 = arith.constant 8 : index
    %111 = vector.load %arg19[%c0_37, %c8] : memref<16x32xbf16, #tpu.memory_space<vmem>>, vector<16x8xbf16>
    tpu.vector_store %arg19[%c0_37, %c8], %110 {strides = array<i32>} : memref<16x32xbf16, #tpu.memory_space<vmem>>, vector<16x8xbf16>,
    %c0_38 = arith.constant 0 : index
    %c0_39 = arith.constant 0 : index
    %c48 = arith.constant 48 : index
    %112 = vector.load %arg5[%c0_38, %c0_39, %c48] : memref<1x32x96xbf16, #tpu.memory_space<vmem>>, vector<1x32x24xbf16>
    %113 = vector.shape_cast %112 : vector<1x32x24xbf16> to vector<32x24xbf16>
    %114 = vector.extract_strided_slice %37 {offsets = [0, 48], sizes = [1, 24], strides = [1, 1]} : vector<1x96xf32> to vector<1x24xf32>
    %cst_40 = arith.constant dense<0.000000e+00> : vector<16x24xf32>
    %115 = tpu.matmul %35, %113, %cst_40 {dimension_numbers = #tpu.dot_dimension_numbers<[1], [0], [0], [1], [0, 0, 1, 1], [], []>} : vector<16x32xbf16>, vector<32x24xbf16>, vector<16x24xf32> -> vector<16x24xf32>
    %116 = vector.broadcast %114 : vector<1x24xf32> to vector<16x24xf32>
    %117 = arith.addf %115, %116 : vector<16x24xf32>
    %118 = vector.extract_strided_slice %117 {offsets = [0, 0], sizes = [16, 8], strides = [1, 1]} : vector<16x24xf32> to vector<16x8xf32>
    %cst_41 = arith.constant 0.353553385 : f32
    %119 = vector.broadcast %cst_41 : f32 to vector<16x8xf32>
    %120 = arith.mulf %118, %119 : vector<16x8xf32>
    %121 = vector.shape_cast %120 : vector<16x8xf32> to vector<2x8x8xf32>
    %122 = arith.truncf %121 : vector<2x8x8xf32> to vector<2x8x8xbf16>
    %123 = vector.extract_strided_slice %117 {offsets = [0, 8], sizes = [16, 8], strides = [1, 1]} : vector<16x24xf32> to vector<16x8xf32>
    %124 = vector.shape_cast %123 : vector<16x8xf32> to vector<2x8x8xf32>
    %125 = arith.truncf %124 : vector<2x8x8xf32> to vector<2x8x8xbf16>
    %126 = vector.extract_strided_slice %117 {offsets = [0, 16], sizes = [16, 8], strides = [1, 1]} : vector<16x24xf32> to vector<16x8xf32>
    %127 = vector.shape_cast %126 : vector<16x8xf32> to vector<2x8x8xf32>
    %128 = arith.truncf %127 : vector<2x8x8xf32> to vector<2x8x8xbf16>
    "tpu.trace_start"() <{level = 10 : i32, message = "bqd,bkd->bqk"}> : () -> ()
    %cst_42 = arith.constant dense<0.000000e+00> : vector<2x8x8xf32>
    %129 = tpu.matmul %122, %125, %cst_42 {dimension_numbers = #tpu.dot_dimension_numbers<[2], [2], [1], [1], [0, 0, 0, 1, 1, 1], [0], [0]>} : vector<2x8x8xbf16>, vector<2x8x8xbf16>, vector<2x8x8xf32> -> vector<2x8x8xf32>
    %cst_43 = arith.constant -1.000000e+30 : f32
    "tpu.trace_stop"() : () -> ()
    %130 = vector.shape_cast %8 : vector<1x8x8xi1> to vector<1x8x8xi1>
    %131 = vector.broadcast %130 : vector<1x8x8xi1> to vector<2x8x8xi1>
    %132 = vector.broadcast %cst_43 : f32 to vector<2x8x8xf32>
    %133 = arith.select %131, %132, %129 : vector<2x8x8xi1>, vector<2x8x8xf32>
    %cst_44 = arith.constant dense<0xFF800000> : vector<2x8xf32>
    %134 = vector.multi_reduction <maximumf>, %133, %cst_44 [2] : vector<2x8x8xf32> to vector<2x8xf32>
    %135 = vector.shape_cast %134 : vector<2x8xf32> to vector<2x8x1xf32>
    %136 = vector.broadcast %135 : vector<2x8x1xf32> to vector<2x8x8xf32>
    %137 = arith.subf %133, %136 : vector<2x8x8xf32>
    %138 = math.exp %137 : vector<2x8x8xf32>
    %cst_45 = arith.constant dense<0.000000e+00> : vector<2x8xf32>
    %139 = vector.multi_reduction <add>, %138, %cst_45 [2] : vector<2x8x8xf32> to vector<2x8xf32>
    %140 = vector.shape_cast %139 : vector<2x8xf32> to vector<2x8x1xf32>
    %141 = arith.truncf %138 : vector<2x8x8xf32> to vector<2x8x8xbf16>
    "tpu.trace_start"() <{level = 10 : i32, message = "bqk,bkd->bqd"}> : () -> ()
    %cst_46 = arith.constant dense<0.000000e+00> : vector<2x8x8xf32>
    %142 = tpu.matmul %141, %128, %cst_46 {dimension_numbers = #tpu.dot_dimension_numbers<[2], [1], [1], [2], [0, 0, 0, 1, 1, 2], [0], [0]>} : vector<2x8x8xbf16>, vector<2x8x8xbf16>, vector<2x8x8xf32> -> vector<2x8x8xf32>
    "tpu.trace_stop"() : () -> ()
    %143 = tpu.reciprocal %140 {approx = true} : vector<2x8x1xf32> -> vector<2x8x1xf32>
    %144 = vector.broadcast %143 : vector<2x8x1xf32> to vector<2x8x8xf32>
    %145 = arith.mulf %142, %144 : vector<2x8x8xf32>
    %146 = vector.shape_cast %145 : vector<2x8x8xf32> to vector<16x8xf32>
    %147 = arith.truncf %146 : vector<16x8xf32> to vector<16x8xbf16>
    %c0_47 = arith.constant 0 : index
    %c16 = arith.constant 16 : index
    %148 = vector.load %arg19[%c0_47, %c16] : memref<16x32xbf16, #tpu.memory_space<vmem>>, vector<16x8xbf16>
    tpu.vector_store %arg19[%c0_47, %c16], %147 {strides = array<i32>} : memref<16x32xbf16, #tpu.memory_space<vmem>>, vector<16x8xbf16>,
    %c0_48 = arith.constant 0 : index
    %c0_49 = arith.constant 0 : index
    %c72 = arith.constant 72 : index
    %149 = vector.load %arg5[%c0_48, %c0_49, %c72] : memref<1x32x96xbf16, #tpu.memory_space<vmem>>, vector<1x32x24xbf16>
    %150 = vector.shape_cast %149 : vector<1x32x24xbf16> to vector<32x24xbf16>
    %151 = vector.extract_strided_slice %37 {offsets = [0, 72], sizes = [1, 24], strides = [1, 1]} : vector<1x96xf32> to vector<1x24xf32>
    %cst_50 = arith.constant dense<0.000000e+00> : vector<16x24xf32>
    %152 = tpu.matmul %35, %150, %cst_50 {dimension_numbers = #tpu.dot_dimension_numbers<[1], [0], [0], [1], [0, 0, 1, 1], [], []>} : vector<16x32xbf16>, vector<32x24xbf16>, vector<16x24xf32> -> vector<16x24xf32>
    %153 = vector.broadcast %151 : vector<1x24xf32> to vector<16x24xf32>
    %154 = arith.addf %152, %153 : vector<16x24xf32>
    %155 = vector.extract_strided_slice %154 {offsets = [0, 0], sizes = [16, 8], strides = [1, 1]} : vector<16x24xf32> to vector<16x8xf32>
    %cst_51 = arith.constant 0.353553385 : f32
    %156 = vector.broadcast %cst_51 : f32 to vector<16x8xf32>
    %157 = arith.mulf %155, %156 : vector<16x8xf32>
    %158 = vector.shape_cast %157 : vector<16x8xf32> to vector<2x8x8xf32>
    %159 = arith.truncf %158 : vector<2x8x8xf32> to vector<2x8x8xbf16>
    %160 = vector.extract_strided_slice %154 {offsets = [0, 8], sizes = [16, 8], strides = [1, 1]} : vector<16x24xf32> to vector<16x8xf32>
    %161 = vector.shape_cast %160 : vector<16x8xf32> to vector<2x8x8xf32>
    %162 = arith.truncf %161 : vector<2x8x8xf32> to vector<2x8x8xbf16>
    %163 = vector.extract_strided_slice %154 {offsets = [0, 16], sizes = [16, 8], strides = [1, 1]} : vector<16x24xf32> to vector<16x8xf32>
    %164 = vector.shape_cast %163 : vector<16x8xf32> to vector<2x8x8xf32>
    %165 = arith.truncf %164 : vector<2x8x8xf32> to vector<2x8x8xbf16>
    "tpu.trace_start"() <{level = 10 : i32, message = "bqd,bkd->bqk"}> : () -> ()
    %cst_52 = arith.constant dense<0.000000e+00> : vector<2x8x8xf32>
    %166 = tpu.matmul %159, %162, %cst_52 {dimension_numbers = #tpu.dot_dimension_numbers<[2], [2], [1], [1], [0, 0, 0, 1, 1, 1], [0], [0]>} : vector<2x8x8xbf16>, vector<2x8x8xbf16>, vector<2x8x8xf32> -> vector<2x8x8xf32>
    %cst_53 = arith.constant -1.000000e+30 : f32
    "tpu.trace_stop"() : () -> ()
    %167 = vector.shape_cast %8 : vector<1x8x8xi1> to vector<1x8x8xi1>
    %168 = vector.broadcast %167 : vector<1x8x8xi1> to vector<2x8x8xi1>
    %169 = vector.broadcast %cst_53 : f32 to vector<2x8x8xf32>
    %170 = arith.select %168, %169, %166 : vector<2x8x8xi1>, vector<2x8x8xf32>
    %cst_54 = arith.constant dense<0xFF800000> : vector<2x8xf32>
    %171 = vector.multi_reduction <maximumf>, %170, %cst_54 [2] : vector<2x8x8xf32> to vector<2x8xf32>
    %172 = vector.shape_cast %171 : vector<2x8xf32> to vector<2x8x1xf32>
    %173 = vector.broadcast %172 : vector<2x8x1xf32> to vector<2x8x8xf32>
    %174 = arith.subf %170, %173 : vector<2x8x8xf32>
    %175 = math.exp %174 : vector<2x8x8xf32>
    %cst_55 = arith.constant dense<0.000000e+00> : vector<2x8xf32>
    %176 = vector.multi_reduction <add>, %175, %cst_55 [2] : vector<2x8x8xf32> to vector<2x8xf32>
    %177 = vector.shape_cast %176 : vector<2x8xf32> to vector<2x8x1xf32>
    %178 = arith.truncf %175 : vector<2x8x8xf32> to vector<2x8x8xbf16>
    "tpu.trace_start"() <{level = 10 : i32, message = "bqk,bkd->bqd"}> : () -> ()
    %cst_56 = arith.constant dense<0.000000e+00> : vector<2x8x8xf32>
    %179 = tpu.matmul %178, %165, %cst_56 {dimension_numbers = #tpu.dot_dimension_numbers<[2], [1], [1], [2], [0, 0, 0, 1, 1, 2], [0], [0]>} : vector<2x8x8xbf16>, vector<2x8x8xbf16>, vector<2x8x8xf32> -> vector<2x8x8xf32>
    "tpu.trace_stop"() : () -> ()
    %180 = tpu.reciprocal %177 {approx = true} : vector<2x8x1xf32> -> vector<2x8x1xf32>
    %181 = vector.broadcast %180 : vector<2x8x1xf32> to vector<2x8x8xf32>
    %182 = arith.mulf %179, %181 : vector<2x8x8xf32>
    %183 = vector.shape_cast %182 : vector<2x8x8xf32> to vector<16x8xf32>
    %184 = arith.truncf %183 : vector<16x8xf32> to vector<16x8xbf16>
    %c0_57 = arith.constant 0 : index
    %c24_58 = arith.constant 24 : index
    %185 = vector.load %arg19[%c0_57, %c24_58] : memref<16x32xbf16, #tpu.memory_space<vmem>>, vector<16x8xbf16>
    tpu.vector_store %arg19[%c0_57, %c24_58], %184 {strides = array<i32>} : memref<16x32xbf16, #tpu.memory_space<vmem>>, vector<16x8xbf16>,
    %c0_59 = arith.constant 0 : index
    %c0_60 = arith.constant 0 : index
    %186 = vector.load %arg19[%c0_59, %c0_60] : memref<16x32xbf16, #tpu.memory_space<vmem>>, vector<16x32xbf16>
    %c0_61 = arith.constant 0 : index
    %c0_62 = arith.constant 0 : index
    %c0_63 = arith.constant 0 : index
    %187 = vector.load %arg7[%c0_61, %c0_62, %c0_63] : memref<1x32x32xbf16, #tpu.memory_space<vmem>>, vector<1x32x32xbf16>
    %188 = vector.shape_cast %187 : vector<1x32x32xbf16> to vector<32x32xbf16>
    %cst_64 = arith.constant dense<0.000000e+00> : vector<16x32xf32>
    %189 = tpu.matmul %186, %188, %cst_64 {dimension_numbers = #tpu.dot_dimension_numbers<[1], [0], [0], [1], [0, 0, 1, 1], [], []>} : vector<16x32xbf16>, vector<32x32xbf16>, vector<16x32xf32> -> vector<16x32xf32>
    %c0_65 = arith.constant 0 : index
    %c0_66 = arith.constant 0 : index
    %c0_67 = arith.constant 0 : index
    %190 = vector.load %arg8[%c0_65, %c0_66, %c0_67] : memref<1x1x32xf32, #tpu.memory_space<vmem>>, vector<1x1x32xf32>
    %191 = vector.shape_cast %190 : vector<1x1x32xf32> to vector<1x32xf32>
    %192 = vector.broadcast %191 : vector<1x32xf32> to vector<16x32xf32>
    %193 = arith.addf %189, %192 : vector<16x32xf32>
    %194 = arith.addf %4, %193 : vector<16x32xf32>
    %c0_68 = arith.constant 0 : index
    %c0_69 = arith.constant 0 : index
    %c0_70 = arith.constant 0 : index
    %195 = vector.load %arg9[%c0_68, %c0_69, %c0_70] : memref<1x1x32xf32, #tpu.memory_space<vmem>>, vector<1x1x32xf32>
    %196 = vector.shape_cast %195 : vector<1x1x32xf32> to vector<1x32xf32>
    %c0_71 = arith.constant 0 : index
    %c0_72 = arith.constant 0 : index
    %c0_73 = arith.constant 0 : index
    %197 = vector.load %arg10[%c0_71, %c0_72, %c0_73] : memref<1x1x32xf32, #tpu.memory_space<vmem>>, vector<1x1x32xf32>
    %198 = vector.shape_cast %197 : vector<1x1x32xf32> to vector<1x32xf32>
    %cst_74 = arith.constant dense<0.000000e+00> : vector<16xf32>
    %199 = vector.multi_reduction <add>, %194, %cst_74 [1] : vector<16x32xf32> to vector<16xf32>
    %200 = vector.shape_cast %199 : vector<16xf32> to vector<16x1xf32>
    %cst_75 = arith.constant 3.200000e+01 : f32
    %201 = vector.broadcast %cst_75 : f32 to vector<16x1xf32>
    %202 = arith.divf %200, %201 : vector<16x1xf32>
    %203 = arith.mulf %194, %194 : vector<16x32xf32>
    %cst_76 = arith.constant dense<0.000000e+00> : vector<16xf32>
    %204 = vector.multi_reduction <add>, %203, %cst_76 [1] : vector<16x32xf32> to vector<16xf32>
    %205 = vector.shape_cast %204 : vector<16xf32> to vector<16x1xf32>
    %cst_77 = arith.constant 3.200000e+01 : f32
    %206 = vector.broadcast %cst_77 : f32 to vector<16x1xf32>
    %207 = arith.divf %205, %206 : vector<16x1xf32>
    %208 = arith.mulf %202, %202 : vector<16x1xf32>
    %209 = arith.subf %207, %208 : vector<16x1xf32>
    %210 = vector.broadcast %202 : vector<16x1xf32> to vector<16x32xf32>
    %211 = arith.subf %194, %210 : vector<16x32xf32>
    %cst_78 = arith.constant 9.99999974E-6 : f32
    %212 = vector.broadcast %cst_78 : f32 to vector<16x1xf32>
    %213 = arith.addf %209, %212 : vector<16x1xf32>
    %214 = math.rsqrt %213 : vector<16x1xf32>
    %215 = vector.broadcast %214 : vector<16x1xf32> to vector<16x32xf32>
    %216 = arith.mulf %211, %215 : vector<16x32xf32>
    %217 = vector.broadcast %196 : vector<1x32xf32> to vector<16x32xf32>
    %218 = arith.mulf %216, %217 : vector<16x32xf32>
    %219 = vector.broadcast %198 : vector<1x32xf32> to vector<16x32xf32>
    %220 = arith.addf %218, %219 : vector<16x32xf32>
    %221 = arith.truncf %220 : vector<16x32xf32> to vector<16x32xbf16>
    %c0_79 = arith.constant 0 : index
    %c0_80 = arith.constant 0 : index
    %c0_81 = arith.constant 0 : index
    %222 = vector.load %arg11[%c0_79, %c0_80, %c0_81] : memref<1x32x128xbf16, #tpu.memory_space<vmem>>, vector<1x32x128xbf16>
    %223 = vector.shape_cast %222 : vector<1x32x128xbf16> to vector<32x128xbf16>
    %cst_82 = arith.constant dense<0.000000e+00> : vector<16x128xf32>
    %224 = tpu.matmul %221, %223, %cst_82 {dimension_numbers = #tpu.dot_dimension_numbers<[1], [0], [0], [1], [0, 0, 1, 1], [], []>} : vector<16x32xbf16>, vector<32x128xbf16>, vector<16x128xf32> -> vector<16x128xf32>
    %c0_83 = arith.constant 0 : index
    %c0_84 = arith.constant 0 : index
    %c0_85 = arith.constant 0 : index
    %225 = vector.load %arg12[%c0_83, %c0_84, %c0_85] : memref<1x1x128xf32, #tpu.memory_space<vmem>>, vector<1x1x128xf32>
    %226 = vector.shape_cast %225 : vector<1x1x128xf32> to vector<1x128xf32>
    %227 = vector.broadcast %226 : vector<1x128xf32> to vector<16x128xf32>
    %228 = arith.addf %224, %227 : vector<16x128xf32>
    %cst_86 = arith.constant 5.000000e-01 : f32
    %229 = vector.broadcast %cst_86 : f32 to vector<16x128xf32>
    %230 = arith.mulf %229, %228 : vector<16x128xf32>
    %cst_87 = arith.constant 4.471500e-02 : f32
    %231 = vector.broadcast %cst_87 : f32 to vector<16x128xf32>
    %232 = arith.mulf %231, %228 : vector<16x128xf32>
    %233 = arith.mulf %232, %228 : vector<16x128xf32>
    %234 = arith.mulf %233, %228 : vector<16x128xf32>
    %235 = arith.addf %228, %234 : vector<16x128xf32>
    %cst_88 = arith.constant 0.797884583 : f32
    %236 = vector.broadcast %cst_88 : f32 to vector<16x128xf32>
    %237 = arith.mulf %236, %235 : vector<16x128xf32>
    %238 = math.tanh %237 : vector<16x128xf32>
    %cst_89 = arith.constant 1.000000e+00 : f32
    %239 = vector.broadcast %cst_89 : f32 to vector<16x128xf32>
    %240 = arith.addf %239, %238 : vector<16x128xf32>
    %241 = arith.mulf %230, %240 : vector<16x128xf32>
    %242 = arith.truncf %241 : vector<16x128xf32> to vector<16x128xbf16>
    %c0_90 = arith.constant 0 : index
    %c0_91 = arith.constant 0 : index
    %c0_92 = arith.constant 0 : index
    %243 = vector.load %arg13[%c0_90, %c0_91, %c0_92] : memref<1x128x32xbf16, #tpu.memory_space<vmem>>, vector<1x128x32xbf16>
    %244 = vector.shape_cast %243 : vector<1x128x32xbf16> to vector<128x32xbf16>
    %cst_93 = arith.constant dense<0.000000e+00> : vector<16x32xf32>
    %245 = tpu.matmul %242, %244, %cst_93 {dimension_numbers = #tpu.dot_dimension_numbers<[1], [0], [0], [1], [0, 0, 1, 1], [], []>} : vector<16x128xbf16>, vector<128x32xbf16>, vector<16x32xf32> -> vector<16x32xf32>
    %c0_94 = arith.constant 0 : index
    %c0_95 = arith.constant 0 : index
    %c0_96 = arith.constant 0 : index
    %246 = vector.load %arg14[%c0_94, %c0_95, %c0_96] : memref<1x1x32xf32, #tpu.memory_space<vmem>>, vector<1x1x32xf32>
    %247 = vector.shape_cast %246 : vector<1x1x32xf32> to vector<1x32xf32>
    %248 = vector.broadcast %247 : vector<1x32xf32> to vector<16x32xf32>
    %249 = arith.addf %245, %248 : vector<16x32xf32>
    %250 = arith.addf %194, %249 : vector<16x32xf32>
    %c1_i32 = arith.constant 1 : i32
    %251 = arith.cmpi slt, %arg1, %c1_i32 : i32
    %252 = arith.extui %251 : i1 to i32
    %c0_i32_97 = arith.constant 0 : i32
    %253 = arith.cmpi ne, %252, %c0_i32_97 : i32
    scf.if %253 {
      %257 = vector.shape_cast %250 : vector<16x32xf32> to vector<2x8x32xf32>
      %c0_100 = arith.constant 0 : index
      %c0_101 = arith.constant 0 : index
      %c0_102 = arith.constant 0 : index
      %258 = vector.load %arg18[%c0_100, %c0_101, %c0_102] : memref<2x8x32xf32, #tpu.memory_space<vmem>>, vector<2x8x32xf32>
      tpu.vector_store %arg18[%c0_100, %c0_101, %c0_102], %257 {strides = array<i32>} : memref<2x8x32xf32, #tpu.memory_space<vmem>>, vector<2x8x32xf32>,
    } else {
    }
    %c1_i32_98 = arith.constant 1 : i32
    %254 = arith.cmpi eq, %arg1, %c1_i32_98 : i32
    %255 = arith.extui %254 : i1 to i32
    %c0_i32_99 = arith.constant 0 : i32
    %256 = arith.cmpi ne, %255, %c0_i32_99 : i32
    scf.if %256 {
      %c0_100 = arith.constant 0 : index
      %c0_101 = arith.constant 0 : index
      %257 = vector.load %arg15[%c0_100, %c0_101] : memref<1x32xf32, #tpu.memory_space<vmem>>, vector<1x32xf32>
      %c0_102 = arith.constant 0 : index
      %c0_103 = arith.constant 0 : index
      %258 = vector.load %arg16[%c0_102, %c0_103] : memref<1x32xf32, #tpu.memory_space<vmem>>, vector<1x32xf32>
      %cst_104 = arith.constant dense<0.000000e+00> : vector<16xf32>
      %259 = vector.multi_reduction <add>, %250, %cst_104 [1] : vector<16x32xf32> to vector<16xf32>
      %260 = vector.shape_cast %259 : vector<16xf32> to vector<16x1xf32>
      %cst_105 = arith.constant 3.200000e+01 : f32
      %261 = vector.broadcast %cst_105 : f32 to vector<16x1xf32>
      %262 = arith.divf %260, %261 : vector<16x1xf32>
      %263 = arith.mulf %250, %250 : vector<16x32xf32>
      %cst_106 = arith.constant dense<0.000000e+00> : vector<16xf32>
      %264 = vector.multi_reduction <add>, %263, %cst_106 [1] : vector<16x32xf32> to vector<16xf32>
      %265 = vector.shape_cast %264 : vector<16xf32> to vector<16x1xf32>
      %cst_107 = arith.constant 3.200000e+01 : f32
      %266 = vector.broadcast %cst_107 : f32 to vector<16x1xf32>
      %267 = arith.divf %265, %266 : vector<16x1xf32>
      %268 = arith.mulf %262, %262 : vector<16x1xf32>
      %269 = arith.subf %267, %268 : vector<16x1xf32>
      %270 = vector.broadcast %262 : vector<16x1xf32> to vector<16x32xf32>
      %271 = arith.subf %250, %270 : vector<16x32xf32>
      %cst_108 = arith.constant 9.99999974E-6 : f32
      %272 = vector.broadcast %cst_108 : f32 to vector<16x1xf32>
      %273 = arith.addf %269, %272 : vector<16x1xf32>
      %274 = math.rsqrt %273 : vector<16x1xf32>
      %275 = vector.broadcast %274 : vector<16x1xf32> to vector<16x32xf32>
      %276 = arith.mulf %271, %275 : vector<16x32xf32>
      %277 = vector.broadcast %257 : vector<1x32xf32> to vector<16x32xf32>
      %278 = arith.mulf %276, %277 : vector<16x32xf32>
      %279 = vector.broadcast %258 : vector<1x32xf32> to vector<16x32xf32>
      %280 = arith.addf %278, %279 : vector<16x32xf32>
      %281 = vector.shape_cast %280 : vector<16x32xf32> to vector<2x8x32xf32>
      %282 = arith.truncf %281 : vector<2x8x32xf32> to vector<2x8x32xbf16>
      %c0_109 = arith.constant 0 : index
      %c0_110 = arith.constant 0 : index
      %c0_111 = arith.constant 0 : index
      %283 = vector.load %arg17[%c0_109, %c0_110, %c0_111] : memref<2x8x32xbf16, #tpu.memory_space<vmem>>, vector<2x8x32xbf16>
      tpu.vector_store %arg17[%c0_109, %c0_110, %c0_111], %282 {strides = array<i32>} : memref<2x8x32xbf16, #tpu.memory_space<vmem>>, vector<2x8x32xbf16>,
    } else {
    }
    return
  }
  func.func @transform_0(%arg0: i32, %arg1: i32) -> (i32, i32, i32) {
    %c0_i32 = arith.constant 0 : i32
    %c0_i32_0 = arith.constant 0 : i32
    %c0_i32_1 = arith.constant 0 : i32
    return %arg0, %c0_i32, %c0_i32_0 : i32, i32, i32
  }
  func.func @transform_1(%arg0: i32, %arg1: i32) -> (i32, i32, i32) {
    %c0_i32 = arith.constant 0 : i32
    %c0_i32_0 = arith.constant 0 : i32
    %c0_i32_1 = arith.constant 0 : i32
    return %arg1, %c0_i32, %c0_i32_0 : i32, i32, i32
  }
  func.func @transform_2(%arg0: i32, %arg1: i32) -> (i32, i32, i32) {
    %c0_i32 = arith.constant 0 : i32
    %c0_i32_0 = arith.constant 0 : i32
    %c0_i32_1 = arith.constant 0 : i32
    return %arg1, %c0_i32, %c0_i32_0 : i32, i32, i32
  }
  func.func @transform_3(%arg0: i32, %arg1: i32) -> (i32, i32, i32) {
    %c0_i32 = arith.constant 0 : i32
    %c0_i32_0 = arith.constant 0 : i32
    %c0_i32_1 = arith.constant 0 : i32
    return %arg1, %c0_i32, %c0_i32_0 : i32, i32, i32
  }
  func.func @transform_4(%arg0: i32, %arg1: i32) -> (i32, i32, i32) {
    %c0_i32 = arith.constant 0 : i32
    %c0_i32_0 = arith.constant 0 : i32
    %c0_i32_1 = arith.constant 0 : i32
    return %arg1, %c0_i32, %c0_i32_0 : i32, i32, i32
  }
  func.func @transform_5(%arg0: i32, %arg1: i32) -> (i32, i32, i32) {
    %c0_i32 = arith.constant 0 : i32
    %c0_i32_0 = arith.constant 0 : i32
    %c0_i32_1 = arith.constant 0 : i32
    return %arg1, %c0_i32, %c0_i32_0 : i32, i32, i32
  }
  func.func @transform_6(%arg0: i32, %arg1: i32) -> (i32, i32, i32) {
    %c0_i32 = arith.constant 0 : i32
    %c0_i32_0 = arith.constant 0 : i32
    %c0_i32_1 = arith.constant 0 : i32
    return %arg1, %c0_i32, %c0_i32_0 : i32, i32, i32
  }
  func.func @transform_7(%arg0: i32, %arg1: i32) -> (i32, i32, i32) {
    %c0_i32 = arith.constant 0 : i32
    %c0_i32_0 = arith.constant 0 : i32
    %c0_i32_1 = arith.constant 0 : i32
    return %arg1, %c0_i32, %c0_i32_0 : i32, i32, i32
  }
  func.func @transform_8(%arg0: i32, %arg1: i32) -> (i32, i32, i32) {
    %c0_i32 = arith.constant 0 : i32
    %c0_i32_0 = arith.constant 0 : i32
    %c0_i32_1 = arith.constant 0 : i32
    return %arg1, %c0_i32, %c0_i32_0 : i32, i32, i32
  }
  func.func @transform_9(%arg0: i32, %arg1: i32) -> (i32, i32, i32) {
    %c0_i32 = arith.constant 0 : i32
    %c0_i32_0 = arith.constant 0 : i32
    %c0_i32_1 = arith.constant 0 : i32
    return %arg1, %c0_i32, %c0_i32_0 : i32, i32, i32
  }
  func.func @transform_10(%arg0: i32, %arg1: i32) -> (i32, i32, i32) {
    %c0_i32 = arith.constant 0 : i32
    %c0_i32_0 = arith.constant 0 : i32
    %c0_i32_1 = arith.constant 0 : i32
    return %arg1, %c0_i32, %c0_i32_0 : i32, i32, i32
  }
  func.func @transform_11(%arg0: i32, %arg1: i32) -> (i32, i32, i32) {
    %c0_i32 = arith.constant 0 : i32
    %c0_i32_0 = arith.constant 0 : i32
    %c0_i32_1 = arith.constant 0 : i32
    return %arg1, %c0_i32, %c0_i32_0 : i32, i32, i32
  }
  func.func @transform_12(%arg0: i32, %arg1: i32) -> (i32, i32, i32) {
    %c0_i32 = arith.constant 0 : i32
    %c0_i32_0 = arith.constant 0 : i32
    %c0_i32_1 = arith.constant 0 : i32
    return %arg1, %c0_i32, %c0_i32_0 : i32, i32, i32
  }
  func.func @transform_13(%arg0: i32, %arg1: i32) -> (i32, i32) {
    %c0_i32 = arith.constant 0 : i32
    %c0_i32_0 = arith.constant 0 : i32
    %c0_i32_1 = arith.constant 0 : i32
    return %c0_i32, %c0_i32_0 : i32, i32
  }
  func.func @transform_14(%arg0: i32, %arg1: i32) -> (i32, i32) {
    %c0_i32 = arith.constant 0 : i32
    %c0_i32_0 = arith.constant 0 : i32
    %c0_i32_1 = arith.constant 0 : i32
    return %c0_i32, %c0_i32_0 : i32, i32
  }
  func.func @transform_15(%arg0: i32, %arg1: i32) -> (i32, i32, i32) {
    %c0_i32 = arith.constant 0 : i32
    %c0_i32_0 = arith.constant 0 : i32
    %c0_i32_1 = arith.constant 0 : i32
    return %arg0, %c0_i32, %c0_i32_0 : i32, i32, i32
  }
}

</mosaic_0001>

<llo_original>
// kernel: tpu_custom_call.1
$region0: #{tpu_custom_call.1}
  #allocation0 [shape = 'u32[]', space=smem, size = 0x4, offset = 0x4, fixed_abs, tag = 'smem constant byte address 0x4 - core index']
  #allocation1 [shape = 'u32[72,128]{1,0:T(1,128)}', space=vmem, size = 0x9000, scoped, tag = 'internal scratch']
  #allocation2 [shape = 'f32[2,8,32]{2,1,0:T(8,128)}', space=vmem, size = 0x2000, scoped, tag = 'scratch operand']
  #allocation3 [shape = 'bf16[16,32]{1,0:T(8,128)(2,1)}', space=vmem, size = 0x1000, scoped, tag = 'scratch operand']
  %s0 = inlined_call_operand.vmem [shape: f32[2,8,32], index: 0, kind: input, shape index: {}]
  %s1 = inlined_call_operand.vmem [shape: f32[2,1,32], index: 1, kind: input, shape index: {}]
  %s2 = inlined_call_operand.vmem [shape: f32[2,1,32], index: 2, kind: input, shape index: {}]
  %s3 = inlined_call_operand.vmem [shape: bf16[2,32,96], index: 3, kind: input, shape index: {}]
  %s4 = inlined_call_operand.vmem [shape: f32[2,1,96], index: 4, kind: input, shape index: {}]
  %s5 = inlined_call_operand.vmem [shape: bf16[2,32,32], index: 5, kind: input, shape index: {}]
  %s6 = inlined_call_operand.vmem [shape: f32[2,1,32], index: 6, kind: input, shape index: {}]
  %s7 = inlined_call_operand.vmem [shape: f32[2,1,32], index: 7, kind: input, shape index: {}]
  %s8 = inlined_call_operand.vmem [shape: f32[2,1,32], index: 8, kind: input, shape index: {}]
  %s9 = inlined_call_operand.vmem [shape: bf16[2,32,128], index: 9, kind: input, shape index: {}]
  %s10 = inlined_call_operand.vmem [shape: f32[2,1,128], index: 10, kind: input, shape index: {}]
  %s11 = inlined_call_operand.vmem [shape: bf16[2,128,32], index: 11, kind: input, shape index: {}]
  %s12 = inlined_call_operand.vmem [shape: f32[2,1,32], index: 12, kind: input, shape index: {}]
  %s13 = inlined_call_operand.vmem [shape: f32[1,32], index: 13, kind: input, shape index: {}]
  %s14 = inlined_call_operand.vmem [shape: f32[1,32], index: 14, kind: input, shape index: {}]
  %s15 = inlined_call_operand.hbm [shape: bf16[2,8,32], index: 15, kind: output, shape index: {}]
  %s16 = sld [smem:[#allocation0]]
  $region105: #{tpu_custom_call.1} parent=0
    _
  %s18 = ssub.s32 1, %s16
  %s19 = scalar_select 0, %s18, %s16
  $region1: #{tpu_custom_call.1} parent=0
    #allocation4 [shape = 'u8[4096]{0}', space=vmem, size = 0x1000, scoped, tag = 'output window, operand 0, single buffered']
    #allocation5 [shape = 's32[2]{0}', space=sflag, size = 0x8, scoped, tag = 'scoped memory for tpu_custom_call.1']
    %20 = vsyncpa [#allocation5], 0
    loop: start=0, step=1, limit=4
    $region2: #{tpu_custom_call.1} parent=1 // loop_pre_header
      _
    $region3: #{tpu_custom_call.1} parent=1 // loop_header
      %s22 = sphi 0, %s26
      %p23 = scmp.ge.s32.totalorder %s22, 4
      %s29 = sphi 0, %s41
      %s30 = sphi 0, %s37
      %s31 = sphi 0, %s29
      %s32 = sphi 0, %s30
      %s33 = sphi 0, %s31
      %s34 = sphi 0, %s32
      %s44 = sphi 0, %s46
      %s47 = sphi 0, %s44
      %s48 = sphi 0, %s47
      %s64 = sphi 0, %s48
      %s70 = sphi 0, %s72
      %s73 = sphi 0, %s70
      %s74 = sphi 0, %s73
      %s90 = sphi 0, %s74
      %s96 = sphi 0, %s98
      %s99 = sphi 0, %s96
      %s100 = sphi 0, %s99
      %s116 = sphi 0, %s100
      %s122 = sphi 0, %s124
      %s125 = sphi 0, %s122
      %s126 = sphi 0, %s125
      %s142 = sphi 0, %s126
      %s148 = sphi 0, %s150
      %s151 = sphi 0, %s148
      %s152 = sphi 0, %s151
      %s168 = sphi 0, %s152
      %s174 = sphi 0, %s176
      %s177 = sphi 0, %s174
      %s178 = sphi 0, %s177
      %s194 = sphi 0, %s178
      %s200 = sphi 0, %s202
      %s203 = sphi 0, %s200
      %s204 = sphi 0, %s203
      %s220 = sphi 0, %s204
      %s226 = sphi 0, %s228
      %s229 = sphi 0, %s226
      %s230 = sphi 0, %s229
      %s246 = sphi 0, %s230
      %s252 = sphi 0, %s254
      %s255 = sphi 0, %s252
      %s256 = sphi 0, %s255
      %s272 = sphi 0, %s256
      %s278 = sphi 0, %s280
      %s281 = sphi 0, %s278
      %s282 = sphi 0, %s281
      %s298 = sphi 0, %s282
      %s304 = sphi 0, %s306
      %s307 = sphi 0, %s304
      %s308 = sphi 0, %s307
      %s324 = sphi 0, %s308
      %s330 = sphi 0, %s332
      %s333 = sphi 0, %s330
      %s334 = sphi 0, %s333
      %s350 = sphi 0, %s334
      %s356 = sphi 0, %s358
      %s359 = sphi 0, %s356
      %s360 = sphi 0, %s359
      %s376 = sphi 0, %s360
      %s380 = sphi 0, %s380
      %s382 = sphi 0, %s380
      %s383 = sphi 0, %s382
      %s397 = sphi 0, %s383
      %s401 = sphi 0, %s401
      %s403 = sphi 0, %s401
      %s404 = sphi 0, %s403
      %s418 = sphi 0, %s404
      %s424 = sphi 0, %s426
      %s427 = sphi 0, %s424
      %s428 = sphi 0, %s427
      %s444 = sphi 0, %s428
    $region4: #{tpu_custom_call.1} parent=1 // loop_header_branch
      %25 = sbr.rel (%p23) target = $region8
    $region5: #{tpu_custom_call.1} parent=1 // loop_body
      %s27 = ssub.s32 %s22, 1
      %s28 = ssub.s32 %s22, 2
      %s35 = sadd.s32 1, %s30
      %p36 = scmp.ge.s32.totalorder %s35, 2
      %s37 = scalar_select %p36, 0, %s35
      %s38 = sadd.s32 1, %s29
      %s39 = scalar_select %p36, %s38, %s29
      %p40 = scmp.ge.s32.totalorder %s39, 1
      %s41 = scalar_select %p40, 0, %s39
      %s42 = ssub.s32 %s29, %s41
      %p43 = scmp.eq.s32.totalorder %s42, 0
      %s45 = sadd.s32 %s44, 1
      %s46 = scalar_select %p43, %s44, %s45
      %p49 = pneg %p43
      %p50 = scmp.eq.s32.totalorder %s22, 1
      %p51 = por %p49, %p50
      %p52 = scmp.ne.s32.totalorder %s44, %s47
      %p53 = scmp.eq.s32.totalorder %s22, 0
      %p54 = por %p52, %p53
      %p55 = scmp.ne.s32.totalorder %s44, %s47
      %p56 = scmp.eq.s32.totalorder %s27, 1
      %p57 = por %p55, %p56
      %p58 = scmp.ne.s32.totalorder %s47, %s48
      %p59 = scmp.eq.s32.totalorder %s27, 0
      %p60 = por %p58, %p59
      %p61 = scmp.ne.s32.totalorder %s47, %s48
      %p62 = scmp.eq.s32.totalorder %s28, 1
      %p63 = por %p61, %p62
      %p65 = scmp.ne.s32.totalorder %s48, %s64
      %p66 = scmp.eq.s32.totalorder %s28, 0
      %p67 = por %p65, %p66
      %s68 = ssub.s32 %s30, %s37
      %p69 = scmp.eq.s32.totalorder %s68, 0
      %s71 = sadd.s32 %s70, 1
      %s72 = scalar_select %p69, %s70, %s71
      %p75 = pneg %p69
      %p76 = scmp.eq.s32.totalorder %s22, 1
      %p77 = por %p75, %p76
      %p78 = scmp.ne.s32.totalorder %s70, %s73
      %p79 = scmp.eq.s32.totalorder %s22, 0
      %p80 = por %p78, %p79
      %p81 = scmp.ne.s32.totalorder %s70, %s73
      %p82 = scmp.eq.s32.totalorder %s27, 1
      %p83 = por %p81, %p82
      %p84 = scmp.ne.s32.totalorder %s73, %s74
      %p85 = scmp.eq.s32.totalorder %s27, 0
      %p86 = por %p84, %p85
      %p87 = scmp.ne.s32.totalorder %s73, %s74
      %p88 = scmp.eq.s32.totalorder %s28, 1
      %p89 = por %p87, %p88
      %p91 = scmp.ne.s32.totalorder %s74, %s90
      %p92 = scmp.eq.s32.totalorder %s28, 0
      %p93 = por %p91, %p92
      %s94 = ssub.s32 %s30, %s37
      %p95 = scmp.eq.s32.totalorder %s94, 0
      %s97 = sadd.s32 %s96, 1
      %s98 = scalar_select %p95, %s96, %s97
      %p101 = pneg %p95
      %p102 = scmp.eq.s32.totalorder %s22, 1
      %p103 = por %p101, %p102
      %p104 = scmp.ne.s32.totalorder %s96, %s99
      %p105 = scmp.eq.s32.totalorder %s22, 0
      %p106 = por %p104, %p105
      %p107 = scmp.ne.s32.totalorder %s96, %s99
      %p108 = scmp.eq.s32.totalorder %s27, 1
      %p109 = por %p107, %p108
      %p110 = scmp.ne.s32.totalorder %s99, %s100
      %p111 = scmp.eq.s32.totalorder %s27, 0
      %p112 = por %p110, %p111
      %p113 = scmp.ne.s32.totalorder %s99, %s100
      %p114 = scmp.eq.s32.totalorder %s28, 1
      %p115 = por %p113, %p114
      %p117 = scmp.ne.s32.totalorder %s100, %s116
      %p118 = scmp.eq.s32.totalorder %s28, 0
      %p119 = por %p117, %p118
      %s120 = ssub.s32 %s30, %s37
      %p121 = scmp.eq.s32.totalorder %s120, 0
      %s123 = sadd.s32 %s122, 1
      %s124 = scalar_select %p121, %s122, %s123
      %p127 = pneg %p121
      %p128 = scmp.eq.s32.totalorder %s22, 1
      %p129 = por %p127, %p128
      %p130 = scmp.ne.s32.totalorder %s122, %s125
      %p131 = scmp.eq.s32.totalorder %s22, 0
      %p132 = por %p130, %p131
      %p133 = scmp.ne.s32.totalorder %s122, %s125
      %p134 = scmp.eq.s32.totalorder %s27, 1
      %p135 = por %p133, %p134
      %p136 = scmp.ne.s32.totalorder %s125, %s126
      %p137 = scmp.eq.s32.totalorder %s27, 0
      %p138 = por %p136, %p137
      %p139 = scmp.ne.s32.totalorder %s125, %s126
      %p140 = scmp.eq.s32.totalorder %s28, 1
      %p141 = por %p139, %p140
      %p143 = scmp.ne.s32.totalorder %s126, %s142
      %p144 = scmp.eq.s32.totalorder %s28, 0
      %p145 = por %p143, %p144
      %s146 = ssub.s32 %s30, %s37
      %p147 = scmp.eq.s32.totalorder %s146, 0
      %s149 = sadd.s32 %s148, 1
      %s150 = scalar_select %p147, %s148, %s149
      %p153 = pneg %p147
      %p154 = scmp.eq.s32.totalorder %s22, 1
      %p155 = por %p153, %p154
      %p156 = scmp.ne.s32.totalorder %s148, %s151
      %p157 = scmp.eq.s32.totalorder %s22, 0
      %p158 = por %p156, %p157
      %p159 = scmp.ne.s32.totalorder %s148, %s151
      %p160 = scmp.eq.s32.totalorder %s27, 1
      %p161 = por %p159, %p160
      %p162 = scmp.ne.s32.totalorder %s151, %s152
      %p163 = scmp.eq.s32.totalorder %s27, 0
      %p164 = por %p162, %p163
      %p165 = scmp.ne.s32.totalorder %s151, %s152
      %p166 = scmp.eq.s32.totalorder %s28, 1
      %p167 = por %p165, %p166
      %p169 = scmp.ne.s32.totalorder %s152, %s168
      %p170 = scmp.eq.s32.totalorder %s28, 0
      %p171 = por %p169, %p170
      %s172 = ssub.s32 %s30, %s37
      %p173 = scmp.eq.s32.totalorder %s172, 0
      %s175 = sadd.s32 %s174, 1
      %s176 = scalar_select %p173, %s174, %s175
      %p179 = pneg %p173
      %p180 = scmp.eq.s32.totalorder %s22, 1
      %p181 = por %p179, %p180
      %p182 = scmp.ne.s32.totalorder %s174, %s177
      %p183 = scmp.eq.s32.totalorder %s22, 0
      %p184 = por %p182, %p183
      %p185 = scmp.ne.s32.totalorder %s174, %s177
      %p186 = scmp.eq.s32.totalorder %s27, 1
      %p187 = por %p185, %p186
      %p188 = scmp.ne.s32.totalorder %s177, %s178
      %p189 = scmp.eq.s32.totalorder %s27, 0
      %p190 = por %p188, %p189
      %p191 = scmp.ne.s32.totalorder %s177, %s178
      %p192 = scmp.eq.s32.totalorder %s28, 1
      %p193 = por %p191, %p192
      %p195 = scmp.ne.s32.totalorder %s178, %s194
      %p196 = scmp.eq.s32.totalorder %s28, 0
      %p197 = por %p195, %p196
      %s198 = ssub.s32 %s30, %s37
      %p199 = scmp.eq.s32.totalorder %s198, 0
      %s201 = sadd.s32 %s200, 1
      %s202 = scalar_select %p199, %s200, %s201
      %p205 = pneg %p199
      %p206 = scmp.eq.s32.totalorder %s22, 1
      %p207 = por %p205, %p206
      %p208 = scmp.ne.s32.totalorder %s200, %s203
      %p209 = scmp.eq.s32.totalorder %s22, 0
      %p210 = por %p208, %p209
      %p211 = scmp.ne.s32.totalorder %s200, %s203
      %p212 = scmp.eq.s32.totalorder %s27, 1
      %p213 = por %p211, %p212
      %p214 = scmp.ne.s32.totalorder %s203, %s204
      %p215 = scmp.eq.s32.totalorder %s27, 0
      %p216 = por %p214, %p215
      %p217 = scmp.ne.s32.totalorder %s203, %s204
      %p218 = scmp.eq.s32.totalorder %s28, 1
      %p219 = por %p217, %p218
      %p221 = scmp.ne.s32.totalorder %s204, %s220
      %p222 = scmp.eq.s32.totalorder %s28, 0
      %p223 = por %p221, %p222
      %s224 = ssub.s32 %s30, %s37
      %p225 = scmp.eq.s32.totalorder %s224, 0
      %s227 = sadd.s32 %s226, 1
      %s228 = scalar_select %p225, %s226, %s227
      %p231 = pneg %p225
      %p232 = scmp.eq.s32.totalorder %s22, 1
      %p233 = por %p231, %p232
      %p234 = scmp.ne.s32.totalorder %s226, %s229
      %p235 = scmp.eq.s32.totalorder %s22, 0
      %p236 = por %p234, %p235
      %p237 = scmp.ne.s32.totalorder %s226, %s229
      %p238 = scmp.eq.s32.totalorder %s27, 1
      %p239 = por %p237, %p238
      %p240 = scmp.ne.s32.totalorder %s229, %s230
      %p241 = scmp.eq.s32.totalorder %s27, 0
      %p242 = por %p240, %p241
      %p243 = scmp.ne.s32.totalorder %s229, %s230
      %p244 = scmp.eq.s32.totalorder %s28, 1
      %p245 = por %p243, %p244
      %p247 = scmp.ne.s32.totalorder %s230, %s246
      %p248 = scmp.eq.s32.totalorder %s28, 0
      %p249 = por %p247, %p248
      %s250 = ssub.s32 %s30, %s37
      %p251 = scmp.eq.s32.totalorder %s250, 0
      %s253 = sadd.s32 %s252, 1
      %s254 = scalar_select %p251, %s252, %s253
      %p257 = pneg %p251
      %p258 = scmp.eq.s32.totalorder %s22, 1
      %p259 = por %p257, %p258
      %p260 = scmp.ne.s32.totalorder %s252, %s255
      %p261 = scmp.eq.s32.totalorder %s22, 0
      %p262 = por %p260, %p261
      %p263 = scmp.ne.s32.totalorder %s252, %s255
      %p264 = scmp.eq.s32.totalorder %s27, 1
      %p265 = por %p263, %p264
      %p266 = scmp.ne.s32.totalorder %s255, %s256
      %p267 = scmp.eq.s32.totalorder %s27, 0
      %p268 = por %p266, %p267
      %p269 = scmp.ne.s32.totalorder %s255, %s256
      %p270 = scmp.eq.s32.totalorder %s28, 1
      %p271 = por %p269, %p270
      %p273 = scmp.ne.s32.totalorder %s256, %s272
      %p274 = scmp.eq.s32.totalorder %s28, 0
      %p275 = por %p273, %p274
      %s276 = ssub.s32 %s30, %s37
      %p277 = scmp.eq.s32.totalorder %s276, 0
      %s279 = sadd.s32 %s278, 1
      %s280 = scalar_select %p277, %s278, %s279
      %p283 = pneg %p277
      %p284 = scmp.eq.s32.totalorder %s22, 1
      %p285 = por %p283, %p284
      %p286 = scmp.ne.s32.totalorder %s278, %s281
      %p287 = scmp.eq.s32.totalorder %s22, 0
      %p288 = por %p286, %p287
      %p289 = scmp.ne.s32.totalorder %s278, %s281
      %p290 = scmp.eq.s32.totalorder %s27, 1
      %p291 = por %p289, %p290
      %p292 = scmp.ne.s32.totalorder %s281, %s282
      %p293 = scmp.eq.s32.totalorder %s27, 0
      %p294 = por %p292, %p293
      %p295 = scmp.ne.s32.totalorder %s281, %s282
      %p296 = scmp.eq.s32.totalorder %s28, 1
      %p297 = por %p295, %p296
      %p299 = scmp.ne.s32.totalorder %s282, %s298
      %p300 = scmp.eq.s32.totalorder %s28, 0
      %p301 = por %p299, %p300
      %s302 = ssub.s32 %s30, %s37
      %p303 = scmp.eq.s32.totalorder %s302, 0
      %s305 = sadd.s32 %s304, 1
      %s306 = scalar_select %p303, %s304, %s305
      %p309 = pneg %p303
      %p310 = scmp.eq.s32.totalorder %s22, 1
      %p311 = por %p309, %p310
      %p312 = scmp.ne.s32.totalorder %s304, %s307
      %p313 = scmp.eq.s32.totalorder %s22, 0
      %p314 = por %p312, %p313
      %p315 = scmp.ne.s32.totalorder %s304, %s307
      %p316 = scmp.eq.s32.totalorder %s27, 1
      %p317 = por %p315, %p316
      %p318 = scmp.ne.s32.totalorder %s307, %s308
      %p319 = scmp.eq.s32.totalorder %s27, 0
      %p320 = por %p318, %p319
      %p321 = scmp.ne.s32.totalorder %s307, %s308
      %p322 = scmp.eq.s32.totalorder %s28, 1
      %p323 = por %p321, %p322
      %p325 = scmp.ne.s32.totalorder %s308, %s324
      %p326 = scmp.eq.s32.totalorder %s28, 0
      %p327 = por %p325, %p326
      %s328 = ssub.s32 %s30, %s37
      %p329 = scmp.eq.s32.totalorder %s328, 0
      %s331 = sadd.s32 %s330, 1
      %s332 = scalar_select %p329, %s330, %s331
      %p335 = pneg %p329
      %p336 = scmp.eq.s32.totalorder %s22, 1
      %p337 = por %p335, %p336
      %p338 = scmp.ne.s32.totalorder %s330, %s333
      %p339 = scmp.eq.s32.totalorder %s22, 0
      %p340 = por %p338, %p339
      %p341 = scmp.ne.s32.totalorder %s330, %s333
      %p342 = scmp.eq.s32.totalorder %s27, 1
      %p343 = por %p341, %p342
      %p344 = scmp.ne.s32.totalorder %s333, %s334
      %p345 = scmp.eq.s32.totalorder %s27, 0
      %p346 = por %p344, %p345
      %p347 = scmp.ne.s32.totalorder %s333, %s334
      %p348 = scmp.eq.s32.totalorder %s28, 1
      %p349 = por %p347, %p348
      %p351 = scmp.ne.s32.totalorder %s334, %s350
      %p352 = scmp.eq.s32.totalorder %s28, 0
      %p353 = por %p351, %p352
      %s354 = ssub.s32 %s30, %s37
      %p355 = scmp.eq.s32.totalorder %s354, 0
      %s357 = sadd.s32 %s356, 1
      %s358 = scalar_select %p355, %s356, %s357
      %p361 = pneg %p355
      %p362 = scmp.eq.s32.totalorder %s22, 1
      %p363 = por %p361, %p362
      %p364 = scmp.ne.s32.totalorder %s356, %s359
      %p365 = scmp.eq.s32.totalorder %s22, 0
      %p366 = por %p364, %p365
      %p367 = scmp.ne.s32.totalorder %s356, %s359
      %p368 = scmp.eq.s32.totalorder %s27, 1
      %p369 = por %p367, %p368
      %p370 = scmp.ne.s32.totalorder %s359, %s360
      %p371 = scmp.eq.s32.totalorder %s27, 0
      %p372 = por %p370, %p371
      %p373 = scmp.ne.s32.totalorder %s359, %s360
      %p374 = scmp.eq.s32.totalorder %s28, 1
      %p375 = por %p373, %p374
      %p377 = scmp.ne.s32.totalorder %s360, %s376
      %p378 = scmp.eq.s32.totalorder %s28, 0
      %p379 = por %p377, %p378
      %s381 = sadd.s32 %s380, 1
      %p384 = scmp.eq.s32.totalorder %s22, 1
      %p385 = scmp.ne.s32.totalorder %s380, %s382
      %p386 = scmp.eq.s32.totalorder %s22, 0
      %p387 = por %p385, %p386
      %p388 = scmp.ne.s32.totalorder %s380, %s382
      %p389 = scmp.eq.s32.totalorder %s27, 1
      %p390 = por %p388, %p389
      %p391 = scmp.ne.s32.totalorder %s382, %s383
      %p392 = scmp.eq.s32.totalorder %s27, 0
      %p393 = por %p391, %p392
      %p394 = scmp.ne.s32.totalorder %s382, %s383
      %p395 = scmp.eq.s32.totalorder %s28, 1
      %p396 = por %p394, %p395
      %p398 = scmp.ne.s32.totalorder %s383, %s397
      %p399 = scmp.eq.s32.totalorder %s28, 0
      %p400 = por %p398, %p399
      %s402 = sadd.s32 %s401, 1
      %p405 = scmp.eq.s32.totalorder %s22, 1
      %p406 = scmp.ne.s32.totalorder %s401, %s403
      %p407 = scmp.eq.s32.totalorder %s22, 0
      %p408 = por %p406, %p407
      %p409 = scmp.ne.s32.totalorder %s401, %s403
      %p410 = scmp.eq.s32.totalorder %s27, 1
      %p411 = por %p409, %p410
      %p412 = scmp.ne.s32.totalorder %s403, %s404
      %p413 = scmp.eq.s32.totalorder %s27, 0
      %p414 = por %p412, %p413
      %p415 = scmp.ne.s32.totalorder %s403, %s404
      %p416 = scmp.eq.s32.totalorder %s28, 1
      %p417 = por %p415, %p416
      %p419 = scmp.ne.s32.totalorder %s404, %s418
      %p420 = scmp.eq.s32.totalorder %s28, 0
      %p421 = por %p419, %p420
      %s422 = ssub.s32 %s29, %s41
      %p423 = scmp.eq.s32.totalorder %s422, 0
      %s425 = sadd.s32 %s424, 1
      %s426 = scalar_select %p423, %s424, %s425
      %p429 = pneg %p423
      %p430 = scmp.eq.s32.totalorder %s22, 1
      %p431 = por %p429, %p430
      %p432 = scmp.ne.s32.totalorder %s424, %s427
      %p433 = scmp.eq.s32.totalorder %s22, 0
      %p434 = por %p432, %p433
      %p435 = scmp.ne.s32.totalorder %s424, %s427
      %p436 = scmp.eq.s32.totalorder %s27, 1
      %p437 = por %p435, %p436
      %p438 = scmp.ne.s32.totalorder %s427, %s428
      %p439 = scmp.eq.s32.totalorder %s27, 0
      %p440 = por %p438, %p439
      %p441 = scmp.ne.s32.totalorder %s427, %s428
      %p442 = scmp.eq.s32.totalorder %s28, 1
      %p443 = por %p441, %p442
      %p445 = scmp.ne.s32.totalorder %s428, %s444
      %p446 = scmp.eq.s32.totalorder %s28, 0
      %p447 = por %p445, %p446
      %p448 = scmp.le.s32.totalorder 1, %s22
      %p449 = scmp.lt.s32.totalorder %s22, 3
      %p450 = pnand %p448, %p449
      %p451 = pneg %p450
      // Predicated region
      $region9: #{tpu_custom_call.1} parent=5 // pred_check
        _
      $region10: #{tpu_custom_call.1} parent=5 // pred_check_branch
        %453 = sbr.rel (%p450) target = $region12
      $region11: #{tpu_custom_call.1} parent=5 // pred_region
        %s454 = ssub.s32 %s22, 1
        // Predicated region
        $region13: #{tpu_custom_call.1} parent=11 // pred_check
          %p455 = pneg %p60
        $region14: #{tpu_custom_call.1} parent=11 // pred_check_branch
          %457 = sbr.rel (%p455) target = $region16
        $region15: #{tpu_custom_call.1} parent=11 // pred_region
          %s458 = smul.u32 2, %s31
          %p459 = scmp.lt.s32.totalorder %s458, 1
          %s460 = scalar_select %p459, %s458, 1
          %s461 = smul.addr %s460, 8
          %s462 = scalar_lea.vmem %s0, %s461
          %s463 = smul.u32 2, %s31
        $region16: #{tpu_custom_call.1} parent=11 // pred_fallthru
          _
        // Predicated region
        $region17: #{tpu_custom_call.1} parent=11 // pred_check
          %p464 = pneg %p393
        $region18: #{tpu_custom_call.1} parent=11 // pred_check_branch
          %466 = sbr.rel (%p464) target = $region20
        $region19: #{tpu_custom_call.1} parent=11 // pred_region
          _
        $region20: #{tpu_custom_call.1} parent=11 // pred_fallthru
          _
        // Predicated region
        $region21: #{tpu_custom_call.1} parent=11 // pred_check
          %p467 = pneg %p414
        $region22: #{tpu_custom_call.1} parent=11 // pred_check_branch
          %469 = sbr.rel (%p467) target = $region24
        $region23: #{tpu_custom_call.1} parent=11 // pred_region
          _
        $region24: #{tpu_custom_call.1} parent=11 // pred_fallthru
          _
      $region12: #{tpu_custom_call.1} parent=5 // pred_fallthru
        _
      %p470 = scmp.lt.s32.totalorder %s22, 2
      // Predicated region
      $region25: #{tpu_custom_call.1} parent=5 // pred_check
        %p471 = pneg %p470
      $region26: #{tpu_custom_call.1} parent=5 // pred_check_branch
        %473 = sbr.rel (%p471) target = $region28
      $region27: #{tpu_custom_call.1} parent=5 // pred_region
        // Predicated region
        $region29: #{tpu_custom_call.1} parent=27 // pred_check
          %p474 = pneg %p80
        $region30: #{tpu_custom_call.1} parent=27 // pred_check_branch
          %476 = sbr.rel (%p474) target = $region32
        $region31: #{tpu_custom_call.1} parent=27 // pred_region
          %p477 = scmp.lt.s32.totalorder %s30, 1
          %s478 = scalar_select %p477, %s30, 1
          %s479 = scalar_lea.vmem %s1, %s478
        $region32: #{tpu_custom_call.1} parent=27 // pred_fallthru
          _
        // Predicated region
        $region33: #{tpu_custom_call.1} parent=27 // pred_check
          %p480 = pneg %p106
        $region34: #{tpu_custom_call.1} parent=27 // pred_check_branch
          %482 = sbr.rel (%p480) target = $region36
        $region35: #{tpu_custom_call.1} parent=27 // pred_region
          %p483 = scmp.lt.s32.totalorder %s30, 1
          %s484 = scalar_select %p483, %s30, 1
          %s485 = scalar_lea.vmem %s2, %s484
        $region36: #{tpu_custom_call.1} parent=27 // pred_fallthru
          _
        // Predicated region
        $region37: #{tpu_custom_call.1} parent=27 // pred_check
          %p486 = pneg %p132
        $region38: #{tpu_custom_call.1} parent=27 // pred_check_branch
          %488 = sbr.rel (%p486) target = $region40
        $region39: #{tpu_custom_call.1} parent=27 // pred_region
          %p489 = scmp.lt.s32.totalorder %s30, 1
          %s490 = scalar_select %p489, %s30, 1
          %s491 = smul.addr %s490, 4
          %s492 = smul.addr %s491, 4
          %s493 = scalar_lea.vmem %s3, %s492
        $region40: #{tpu_custom_call.1} parent=27 // pred_fallthru
          _
        // Predicated region
        $region41: #{tpu_custom_call.1} parent=27 // pred_check
          %p494 = pneg %p158
        $region42: #{tpu_custom_call.1} parent=27 // pred_check_branch
          %496 = sbr.rel (%p494) target = $region44
        $region43: #{tpu_custom_call.1} parent=27 // pred_region
          %p497 = scmp.lt.s32.totalorder %s30, 1
          %s498 = scalar_select %p497, %s30, 1
          %s499 = scalar_lea.vmem %s4, %s498
        $region44: #{tpu_custom_call.1} parent=27 // pred_fallthru
          _
        // Predicated region
        $region45: #{tpu_custom_call.1} parent=27 // pred_check
          %p500 = pneg %p184
        $region46: #{tpu_custom_call.1} parent=27 // pred_check_branch
          %502 = sbr.rel (%p500) target = $region48
        $region47: #{tpu_custom_call.1} parent=27 // pred_region
          %p503 = scmp.lt.s32.totalorder %s30, 1
          %s504 = scalar_select %p503, %s30, 1
          %s505 = smul.addr %s504, 4
          %s506 = smul.addr %s505, 4
          %s507 = scalar_lea.vmem %s5, %s506
        $region48: #{tpu_custom_call.1} parent=27 // pred_fallthru
          _
        // Predicated region
        $region49: #{tpu_custom_call.1} parent=27 // pred_check
          %p508 = pneg %p210
        $region50: #{tpu_custom_call.1} parent=27 // pred_check_branch
          %510 = sbr.rel (%p508) target = $region52
        $region51: #{tpu_custom_call.1} parent=27 // pred_region
          %p511 = scmp.lt.s32.totalorder %s30, 1
          %s512 = scalar_select %p511, %s30, 1
          %s513 = scalar_lea.vmem %s6, %s512
        $region52: #{tpu_custom_call.1} parent=27 // pred_fallthru
          _
        // Predicated region
        $region53: #{tpu_custom_call.1} parent=27 // pred_check
          %p514 = pneg %p236
        $region54: #{tpu_custom_call.1} parent=27 // pred_check_branch
          %516 = sbr.rel (%p514) target = $region56
        $region55: #{tpu_custom_call.1} parent=27 // pred_region
          %p517 = scmp.lt.s32.totalorder %s30, 1
          %s518 = scalar_select %p517, %s30, 1
          %s519 = scalar_lea.vmem %s7, %s518
        $region56: #{tpu_custom_call.1} parent=27 // pred_fallthru
          _
        // Predicated region
        $region57: #{tpu_custom_call.1} parent=27 // pred_check
          %p520 = pneg %p262
        $region58: #{tpu_custom_call.1} parent=27 // pred_check_branch
          %522 = sbr.rel (%p520) target = $region60
        $region59: #{tpu_custom_call.1} parent=27 // pred_region
          %p523 = scmp.lt.s32.totalorder %s30, 1
          %s524 = scalar_select %p523, %s30, 1
          %s525 = scalar_lea.vmem %s8, %s524
        $region60: #{tpu_custom_call.1} parent=27 // pred_fallthru
          _
        // Predicated region
        $region61: #{tpu_custom_call.1} parent=27 // pred_check
          %p526 = pneg %p288
        $region62: #{tpu_custom_call.1} parent=27 // pred_check_branch
          %528 = sbr.rel (%p526) target = $region64
        $region63: #{tpu_custom_call.1} parent=27 // pred_region
          %p529 = scmp.lt.s32.totalorder %s30, 1
          %s530 = scalar_select %p529, %s30, 1
          %s531 = smul.addr %s530, 4
          %s532 = smul.addr %s531, 4
          %s533 = scalar_lea.vmem %s9, %s532
        $region64: #{tpu_custom_call.1} parent=27 // pred_fallthru
          _
        // Predicated region
        $region65: #{tpu_custom_call.1} parent=27 // pred_check
          %p534 = pneg %p314
        $region66: #{tpu_custom_call.1} parent=27 // pred_check_branch
          %536 = sbr.rel (%p534) target = $region68
        $region67: #{tpu_custom_call.1} parent=27 // pred_region
          %p537 = scmp.lt.s32.totalorder %s30, 1
          %s538 = scalar_select %p537, %s30, 1
          %s539 = scalar_lea.vmem %s10, %s538
        $region68: #{tpu_custom_call.1} parent=27 // pred_fallthru
          _
        // Predicated region
        $region69: #{tpu_custom_call.1} parent=27 // pred_check
          %p540 = pneg %p340
        $region70: #{tpu_custom_call.1} parent=27 // pred_check_branch
          %542 = sbr.rel (%p540) target = $region72
        $region71: #{tpu_custom_call.1} parent=27 // pred_region
          %p543 = scmp.lt.s32.totalorder %s30, 1
          %s544 = scalar_select %p543, %s30, 1
          %s545 = smul.addr %s544, 16
          %s546 = smul.addr %s545, 4
          %s547 = scalar_lea.vmem %s11, %s546
        $region72: #{tpu_custom_call.1} parent=27 // pred_fallthru
          _
        // Predicated region
        $region73: #{tpu_custom_call.1} parent=27 // pred_check
          %p548 = pneg %p366
        $region74: #{tpu_custom_call.1} parent=27 // pred_check_branch
          %550 = sbr.rel (%p548) target = $region76
        $region75: #{tpu_custom_call.1} parent=27 // pred_region
          %p551 = scmp.lt.s32.totalorder %s30, 1
          %s552 = scalar_select %p551, %s30, 1
          %s553 = scalar_lea.vmem %s12, %s552
        $region76: #{tpu_custom_call.1} parent=27 // pred_fallthru
          _
      $region28: #{tpu_custom_call.1} parent=5 // pred_fallthru
        _
      %p554 = scmp.le.s32.totalorder 1, %s22
      %p555 = scmp.lt.s32.totalorder %s22, 3
      %p556 = pnand %p554, %p555
      %p557 = pneg %p556
      // Predicated region
      $region77: #{tpu_custom_call.1} parent=5 // pred_check
        _
      $region78: #{tpu_custom_call.1} parent=5 // pred_check_branch
        %559 = sbr.rel (%p556) target = $region80
      $region79: #{tpu_custom_call.1} parent=5 // pred_region
        %s560 = ssub.s32 %s22, 1
        %s561 = smul.u32 2, %s31
        %p562 = scmp.lt.s32.totalorder %s561, 1
        %s563 = scalar_select %p562, %s561, 1
        %s564 = smul.addr %s563, 8
        %s565 = scalar_lea.vmem %s0, %s564
        %p566 = pneg %p60
        %p567 = pneg %p57
        %p568 = scmp.lt.s32.totalorder %s32, 1
        %s569 = scalar_select %p568, %s32, 1
        %s570 = scalar_lea.vmem %s1, %s569
        %p571 = pneg %p86
        %p572 = pneg %p83
        %p573 = scmp.lt.s32.totalorder %s32, 1
        %s574 = scalar_select %p573, %s32, 1
        %s575 = scalar_lea.vmem %s2, %s574
        %p576 = pneg %p112
        %p577 = pneg %p109
        %p578 = scmp.lt.s32.totalorder %s32, 1
        %s579 = scalar_select %p578, %s32, 1
        %s580 = smul.addr %s579, 4
        %s581 = smul.addr %s580, 4
        %s582 = scalar_lea.vmem %s3, %s581
        %p583 = pneg %p138
        %p584 = pneg %p135
        %p585 = scmp.lt.s32.totalorder %s32, 1
        %s586 = scalar_select %p585, %s32, 1
        %s587 = scalar_lea.vmem %s4, %s586
        %p588 = pneg %p164
        %p589 = pneg %p161
        %p590 = scmp.lt.s32.totalorder %s32, 1
        %s591 = scalar_select %p590, %s32, 1
        %s592 = smul.addr %s591, 4
        %s593 = smul.addr %s592, 4
        %s594 = scalar_lea.vmem %s5, %s593
        %p595 = pneg %p190
        %p596 = pneg %p187
        %p597 = scmp.lt.s32.totalorder %s32, 1
        %s598 = scalar_select %p597, %s32, 1
        %s599 = scalar_lea.vmem %s6, %s598
        %p600 = pneg %p216
        %p601 = pneg %p213
        %p602 = scmp.lt.s32.totalorder %s32, 1
        %s603 = scalar_select %p602, %s32, 1
        %s604 = scalar_lea.vmem %s7, %s603
        %p605 = pneg %p242
        %p606 = pneg %p239
        %p607 = scmp.lt.s32.totalorder %s32, 1
        %s608 = scalar_select %p607, %s32, 1
        %s609 = scalar_lea.vmem %s8, %s608
        %p610 = pneg %p268
        %p611 = pneg %p265
        %p612 = scmp.lt.s32.totalorder %s32, 1
        %s613 = scalar_select %p612, %s32, 1
        %s614 = smul.addr %s613, 4
        %s615 = smul.addr %s614, 4
        %s616 = scalar_lea.vmem %s9, %s615
        %p617 = pneg %p294
        %p618 = pneg %p291
        %p619 = scmp.lt.s32.totalorder %s32, 1
        %s620 = scalar_select %p619, %s32, 1
        %s621 = scalar_lea.vmem %s10, %s620
        %p622 = pneg %p320
        %p623 = pneg %p317
        %p624 = scmp.lt.s32.totalorder %s32, 1
        %s625 = scalar_select %p624, %s32, 1
        %s626 = smul.addr %s625, 16
        %s627 = smul.addr %s626, 4
        %s628 = scalar_lea.vmem %s11, %s627
        %p629 = pneg %p346
        %p630 = pneg %p343
        %p631 = scmp.lt.s32.totalorder %s32, 1
        %s632 = scalar_select %p631, %s32, 1
        %s633 = scalar_lea.vmem %s12, %s632
        %p634 = pneg %p372
        %p635 = pneg %p369
        %p636 = pneg %p393
        %p637 = pneg %p390
        %p638 = pneg %p414
        %p639 = pneg %p411
        %p640 = pneg %p440
        %p641 = pneg %p437
        %s642 = smul.u32 2, %s31
        %p643 = scmp.lt.s32.totalorder %s642, 1
        %s644 = scalar_select %p643, %s642, 1
        %s645 = smul.addr %s644, 8
        %s646 = scalar_lea.vmem %s0, %s645
        %s647 = smul.u32 2, %s31
        %p648 = scmp.lt.s32.totalorder %s32, 1
        %s649 = scalar_select %p648, %s32, 1
        %s650 = scalar_lea.vmem %s1, %s649
        %p651 = scmp.lt.s32.totalorder %s32, 1
        %s652 = scalar_select %p651, %s32, 1
        %s653 = scalar_lea.vmem %s2, %s652
        %p654 = scmp.lt.s32.totalorder %s32, 1
        %s655 = scalar_select %p654, %s32, 1
        %s656 = smul.addr %s655, 4
        %s657 = smul.addr %s656, 4
        %s658 = scalar_lea.vmem %s3, %s657
        %p659 = scmp.lt.s32.totalorder %s32, 1
        %s660 = scalar_select %p659, %s32, 1
        %s661 = scalar_lea.vmem %s4, %s660
        %p662 = scmp.lt.s32.totalorder %s32, 1
        %s663 = scalar_select %p662, %s32, 1
        %s664 = smul.addr %s663, 4
        %s665 = smul.addr %s664, 4
        %s666 = scalar_lea.vmem %s5, %s665
        %p667 = scmp.lt.s32.totalorder %s32, 1
        %s668 = scalar_select %p667, %s32, 1
        %s669 = scalar_lea.vmem %s6, %s668
        %p670 = scmp.lt.s32.totalorder %s32, 1
        %s671 = scalar_select %p670, %s32, 1
        %s672 = scalar_lea.vmem %s7, %s671
        %p673 = scmp.lt.s32.totalorder %s32, 1
        %s674 = scalar_select %p673, %s32, 1
        %s675 = scalar_lea.vmem %s8, %s674
        %p676 = scmp.lt.s32.totalorder %s32, 1
        %s677 = scalar_select %p676, %s32, 1
        %s678 = smul.addr %s677, 4
        %s679 = smul.addr %s678, 4
        %s680 = scalar_lea.vmem %s9, %s679
        %p681 = scmp.lt.s32.totalorder %s32, 1
        %s682 = scalar_select %p681, %s32, 1
        %s683 = scalar_lea.vmem %s10, %s682
        %p684 = scmp.lt.s32.totalorder %s32, 1
        %s685 = scalar_select %p684, %s32, 1
        %s686 = smul.addr %s685, 16
        %s687 = smul.addr %s686, 4
        %s688 = scalar_lea.vmem %s11, %s687
        %p689 = scmp.lt.s32.totalorder %s32, 1
        %s690 = scalar_select %p689, %s32, 1
        %s691 = scalar_lea.vmem %s12, %s690
        %s692 = smul.u32 2, %s31
        %p694 = scmp.eq.s32.totalorder %s32, 0
        // Predicated region
        $region81: #{tpu_custom_call.1} parent=79 // pred_check
          %p695 = pneg %p694
        $region82: #{tpu_custom_call.1} parent=79 // pred_check_branch
          %697 = sbr.rel (%p695) target = $region84
        $region83: #{tpu_custom_call.1} parent=79 // pred_region
          %v698 = vld [vmem:[%s646] sm:$0xff]
          %v699 = vld [vmem:[%s646 + $0x8] sm:$0xff]
          %vm700 = vcmask 261120
          %701 = vst.msk [vmem:[#allocation2] sm:$0xff] %vm700, %v698
          %702 = vst.msk [vmem:[#allocation2 + $0x8] sm:$0xff] %vm700, %v699
        $region84: #{tpu_custom_call.1} parent=79 // pred_fallthru
          _
        %v703 = vld [vmem:[#allocation2] sm:$0xff]
        %v704 = vld [vmem:[#allocation2 + $0x8] sm:$0xff]
        %v705 = vlaneseq
        %v706 = vshrl.u32 %v705, 7
        %v707 = vlaneseq
        %v708 = vand.u32 %v707, 127
        %vm709 = vcmp.gt.s32.totalorder %v708, %v706
        %v710 = vld [vmem:[%s650] sm:$0x1]
        %v711 = vld [vmem:[%s653] sm:$0x1]
        %vm712 = vcmask 261120
        %v713 = vsel %vm712, %v703, 0.0
        %714 = vadd.xlane.f32.xlu0 %v713
        %v715 = vpop.xlane.xlu0 %714
        %v716 = vsel %vm712, %v704, 0.0
        %717 = vadd.xlane.f32.xlu0 %v716
        %v718 = vpop.xlane.xlu0 %717
        %v719 = vrcp.pop 32.0
        %v720 = vmul.f32 32.0, %v719
        %v721 = vsub.f32 1.0, %v720
        %v722 = vmul.f32 %v719, %v721
        %v723 = vadd.f32 %v719, %v722
        %vm724 = vweird.f32 %v719
        %v725 = vsel %vm724, %v719, %v723
        %v726 = vmul.f32 %v715, %v725
        %v727 = vmul.f32 %v718, %v725
        %v728 = vmul.f32 %v703, %v703
        %v729 = vmul.f32 %v704, %v704
        %v730 = vsel %vm712, %v728, 0.0
        %731 = vadd.xlane.f32.xlu0 %v730
        %v732 = vpop.xlane.xlu0 %731
        %v733 = vsel %vm712, %v729, 0.0
        %734 = vadd.xlane.f32.xlu0 %v733
        %v735 = vpop.xlane.xlu0 %734
        %v736 = vmul.f32 %v732, %v725
        %v737 = vmul.f32 %v735, %v725
        %v738 = vmul.f32 %v726, %v726
        %v739 = vmul.f32 %v727, %v727
        %v740 = vsub.f32 %v736, %v738
        %v741 = vsub.f32 %v737, %v739
        %v742 = vsub.f32 %v703, %v726
        %v743 = vsub.f32 %v704, %v727
        %v744 = vadd.f32 %v740, 1e-05
        %v745 = vadd.f32 %v741, 1e-05
        %v746 = vrsqrt.pop %v744
        %v747 = vmul.f32 %v746, %v744
        %v748 = vmul.f32 %v747, %v746
        %v749 = vmul.f32 0.5, %v748
        %v750 = vsub.f32 1.5, %v749
        %v751 = vmul.f32 %v746, %v750
        %vm752 = vweird.f32 %v744
        %vm753 = vweird.f32 %v746
        %vm754 = vmor %vm752, %vm753
        %v755 = vsel %vm754, %v746, %v751
        %v756 = vrsqrt.pop %v745
        %v757 = vmul.f32 %v756, %v745
        %v758 = vmul.f32 %v757, %v756
        %v759 = vmul.f32 0.5, %v758
        %v760 = vsub.f32 1.5, %v759
        %v761 = vmul.f32 %v756, %v760
        %vm762 = vweird.f32 %v745
        %vm763 = vweird.f32 %v756
        %vm764 = vmor %vm762, %vm763
        %v765 = vsel %vm764, %v756, %v761
        %v766 = vmul.f32 %v742, %v755
        %v767 = vmul.f32 %v743, %v765
        %v769 = vperm.slane %v710, 0
        %v771 = vmul.f32 %v766, %v769
        %v772 = vmul.f32 %v767, %v769
        %v774 = vperm.slane %v711, 0
        %v776 = vadd.f32 %v771, %v774
        %v777 = vadd.f32 %v772, %v774
        %v778 = vpack.c.bf16 %v777, %v776
        %v779 = vld [vmem:[%s661] sm:$0x1]
        %v780 = vld [vmem:[%s658] sm:$0xf]
        %v781 = vld [vmem:[%s658 + $0x4] sm:$0xf]
        %v782 = vld [vmem:[%s658 + $0x8] sm:$0xf]
        %v783 = vld [vmem:[%s658 + $0xc] sm:$0xf]
        %v785 = vperm.slane %v779, 0
        %v791 = vunpack.c.l.b16 %v780
        %v792 = vunpack.c.l.b16 %v781
        %v793 = vunpack.c.l.b16 %v782
        %v794 = vunpack.c.l.b16 %v783
        %v795 = vpack.c.b16 %v792, %v791
        %v796 = vpack.c.b16 %v794, %v793
        %v800 = vsel %vm712, %v778, 0
        %802 = vmatpush.bf16.msra.mxu0 0
        %803 = vmatpush.bf16.msra.mxu0 0
        %804 = vmatpush.bf16.msra.mxu0 0
        %805 = vmatpush.bf16.msra.mxu0 0
        %806 = vmatpush.bf16.msra.mxu0 0
        %807 = vmatpush.bf16.msra.mxu0 0
        %808 = vmatpush.bf16.msra.mxu0 %v796
        %809 = vmatpush.bf16.msra.mxu0 %v795
        %810 = vmatmul.bf16.gmra.mxu0 %v800
        %v811 = vpop.f32.mrf.mxu0
        %v812 = vadd.f32 %v785, %v811
        %v813 = vpop.f32.mrf.mxu0
        %v814 = vadd.f32 %v785, %v813
        %815 = vdwg.mxu0
        %v816 = vmul.f32 %v812, 0.35355338
        %v817 = vmul.f32 %v814, 0.35355338
        %v818 = vpack.c.bf16 %v816, %v816
        %v819 = vpack.c.bf16 %v817, %v817
        %v820 = vpack.c.bf16 %v812, %v812
        %v821 = vpack.c.bf16 %v814, %v814
        %v823 = vunpack.c.l.b16 %v820
        %v824 = vpack.c.b16 %v823, %v823
        %825 = vrot.lane.b32.xlu0 %v824, 120
        %v826 = vpop.permute.xlu0 %825
        %vm827 = vcmask 64512
        %v829 = vsel %vm827, %v818, 0
        %v832 = vsel %vm827, %v826, 0
        %834 = vmatpush.bf16.xpose.msra.mxu0 0
        %835 = vmatpush.bf16.xpose.msra.mxu0 0
        %836 = vmatpush.bf16.xpose.msra.mxu0 0
        %837 = vmatpush.bf16.xpose.msra.mxu0 0
        %838 = vmatpush.bf16.xpose.msra.mxu0 0
        %839 = vmatpush.bf16.xpose.msra.mxu0 0
        %840 = vmatpush.bf16.xpose.msra.mxu0 0
        %841 = vmatpush.bf16.xpose.msra.mxu0 %v832
        %842 = vmatmul.bf16.gmra.mxu0 %v829
        %v843 = vpop.f32.mrf.mxu0
        %v844 = vadd.f32 0.0, %v843
        %v845 = vpop.f32.mrf.mxu0
        %846 = vdwg.mxu0
        %v848 = vunpack.c.l.b16 %v821
        %v849 = vpack.c.b16 %v848, %v848
        %850 = vrot.lane.b32.xlu0 %v849, 120
        %v851 = vpop.permute.xlu0 %850
        %v853 = vsel %vm827, %v819, 0
        %v856 = vsel %vm827, %v851, 0
        %858 = vmatpush.bf16.xpose.msra.mxu0 0
        %859 = vmatpush.bf16.xpose.msra.mxu0 0
        %860 = vmatpush.bf16.xpose.msra.mxu0 0
        %861 = vmatpush.bf16.xpose.msra.mxu0 0
        %862 = vmatpush.bf16.xpose.msra.mxu0 0
        %863 = vmatpush.bf16.xpose.msra.mxu0 0
        %864 = vmatpush.bf16.xpose.msra.mxu0 0
        %865 = vmatpush.bf16.xpose.msra.mxu0 %v856
        %866 = vmatmul.bf16.gmra.mxu0 %v853
        %v867 = vpop.f32.mrf.mxu0
        %v868 = vadd.f32 0.0, %v867
        %v869 = vpop.f32.mrf.mxu0
        %870 = vdwg.mxu0
        %v871 = vsel %vm709, 1, 0
        %vm872 = vcmp.eq.s32.totalorder %v871, 1
        %v873 = vsel %vm872, -1e+30, %v844
        %v874 = vsel %vm872, -1e+30, %v868
        %v875 = vsel %vm827, %v873, -inf
        %876 = vmax.xlane.f32.xlu0 %v875
        %v877 = vpop.xlane.xlu0 %876
        %v878 = vsel %vm827, %v874, -inf
        %879 = vmax.xlane.f32.xlu0 %v878
        %v880 = vpop.xlane.xlu0 %879
        %v881 = vsub.f32 %v873, %v877
        %v882 = vsub.f32 %v874, %v880
        %v883 = vmul.f32 %v881, 1.442695
        %v884 = vpow.pop %v883
        %v885 = vmul.f32 %v882, 1.442695
        %v886 = vpow.pop %v885
        %v887 = vsel %vm827, %v884, 0.0
        %888 = vadd.xlane.f32.xlu0 %v887
        %v889 = vpop.xlane.xlu0 %888
        %v890 = vsel %vm827, %v886, 0.0
        %891 = vadd.xlane.f32.xlu0 %v890
        %v892 = vpop.xlane.xlu0 %891
        %v893 = vpack.c.bf16 %v884, %v884
        %v894 = vpack.c.bf16 %v886, %v886
        %895 = vrot.lane.b32.xlu0 %v824, 112
        %v896 = vpop.permute.xlu0 %895
        %v898 = vsel %vm827, %v893, 0
        %vm900 = vcmask 1043456
        %v902 = vsel %vm900, %v896, 0
        %904 = vmatpush.bf16.msra.mxu0 0
        %905 = vmatpush.bf16.msra.mxu0 0
        %906 = vmatpush.bf16.msra.mxu0 0
        %907 = vmatpush.bf16.msra.mxu0 0
        %908 = vmatpush.bf16.msra.mxu0 0
        %909 = vmatpush.bf16.msra.mxu0 0
        %910 = vmatpush.bf16.msra.mxu0 0
        %911 = vmatpush.bf16.msra.mxu0 %v902
        %912 = vmatmul.bf16.gmra.mxu0 %v898
        %v913 = vpop.f32.mrf.mxu0
        %v914 = vadd.f32 0.0, %v913
        %v915 = vpop.f32.mrf.mxu0
        %916 = vdwg.mxu0
        %917 = vrot.lane.b32.xlu0 %v849, 112
        %v918 = vpop.permute.xlu0 %917
        %v920 = vsel %vm827, %v894, 0
        %v923 = vsel %vm900, %v918, 0
        %925 = vmatpush.bf16.msra.mxu0 0
        %926 = vmatpush.bf16.msra.mxu0 0
        %927 = vmatpush.bf16.msra.mxu0 0
        %928 = vmatpush.bf16.msra.mxu0 0
        %929 = vmatpush.bf16.msra.mxu0 0
        %930 = vmatpush.bf16.msra.mxu0 0
        %931 = vmatpush.bf16.msra.mxu0 0
        %932 = vmatpush.bf16.msra.mxu0 %v923
        %933 = vmatmul.bf16.gmra.mxu0 %v920
        %v934 = vpop.f32.mrf.mxu0
        %v935 = vadd.f32 0.0, %v934
        %v936 = vpop.f32.mrf.mxu0
        %937 = vdwg.mxu0
        %v938 = vrcp.pop %v889
        %v939 = vrcp.pop %v892
        %v940 = vmul.f32 %v914, %v938
        %v941 = vmul.f32 %v935, %v939
        %v942 = vpack.c.bf16 %v940, %v940
        %v943 = vpack.c.bf16 %v941, %v941
        %vm944 = vcmask 60416
        %945 = vst.msk [vmem:[#allocation3] sm:$0xf] %vm944, %v942
        %946 = vst.msk [vmem:[#allocation3 + $0x4] sm:$0xf] %vm944, %v943
        %v947 = vld [vmem:[%s658] sm:$0xf]
        %v948 = vld [vmem:[%s658 + $0x4] sm:$0xf]
        %v949 = vld [vmem:[%s658 + $0x8] sm:$0xf]
        %v950 = vld [vmem:[%s658 + $0xc] sm:$0xf]
        %v955 = vunpack.c.l.b16 %v947
        %v956 = vunpack.c.l.b16 %v948
        %v957 = vunpack.c.l.b16 %v949
        %v958 = vunpack.c.l.b16 %v950
        %v959 = vpack.c.b16 %v956, %v955
        %v960 = vpack.c.b16 %v958, %v957
        %961 = vrot.lane.b32.xlu0 %v959, 104
        %v962 = vpop.permute.xlu0 %961
        %963 = vrot.lane.b32.xlu0 %v960, 104
        %v964 = vpop.permute.xlu0 %963
        %967 = vrot.lane.b32.xlu0 %v785, 104
        %v968 = vpop.permute.xlu0 %967
        %970 = vmatpush.bf16.msra.mxu0 0
        %971 = vmatpush.bf16.msra.mxu0 0
        %972 = vmatpush.bf16.msra.mxu0 0
        %973 = vmatpush.bf16.msra.mxu0 0
        %974 = vmatpush.bf16.msra.mxu0 0
        %975 = vmatpush.bf16.msra.mxu0 0
        %976 = vmatpush.bf16.msra.mxu0 %v964
        %977 = vmatpush.bf16.msra.mxu0 %v962
        %978 = vmatmul.bf16.gmra.mxu0 %v800
        %v979 = vpop.f32.mrf.mxu0
        %v980 = vadd.f32 %v968, %v979
        %v981 = vpop.f32.mrf.mxu0
        %v982 = vadd.f32 %v968, %v981
        %983 = vdwg.mxu0
        %v984 = vmul.f32 %v980, 0.35355338
        %v985 = vmul.f32 %v982, 0.35355338
        %v986 = vpack.c.bf16 %v984, %v984
        %v987 = vpack.c.bf16 %v985, %v985
        %v988 = vpack.c.bf16 %v980, %v980
        %v989 = vpack.c.bf16 %v982, %v982
        %v991 = vunpack.c.l.b16 %v988
        %v992 = vpack.c.b16 %v991, %v991
        %993 = vrot.lane.b32.xlu0 %v992, 120
        %v994 = vpop.permute.xlu0 %993
        %v996 = vsel %vm827, %v986, 0
        %v999 = vsel %vm827, %v994, 0
        %1001 = vmatpush.bf16.xpose.msra.mxu0 0
        %1002 = vmatpush.bf16.xpose.msra.mxu0 0
        %1003 = vmatpush.bf16.xpose.msra.mxu0 0
        %1004 = vmatpush.bf16.xpose.msra.mxu0 0
        %1005 = vmatpush.bf16.xpose.msra.mxu0 0
        %1006 = vmatpush.bf16.xpose.msra.mxu0 0
        %1007 = vmatpush.bf16.xpose.msra.mxu0 0
        %1008 = vmatpush.bf16.xpose.msra.mxu0 %v999
        %1009 = vmatmul.bf16.gmra.mxu0 %v996
        %v1010 = vpop.f32.mrf.mxu0
        %v1011 = vadd.f32 0.0, %v1010
        %v1012 = vpop.f32.mrf.mxu0
        %1013 = vdwg.mxu0
        %v1015 = vunpack.c.l.b16 %v989
        %v1016 = vpack.c.b16 %v1015, %v1015
        %1017 = vrot.lane.b32.xlu0 %v1016, 120
        %v1018 = vpop.permute.xlu0 %1017
        %v1020 = vsel %vm827, %v987, 0
        %v1023 = vsel %vm827, %v1018, 0
        %1025 = vmatpush.bf16.xpose.msra.mxu0 0
        %1026 = vmatpush.bf16.xpose.msra.mxu0 0
        %1027 = vmatpush.bf16.xpose.msra.mxu0 0
        %1028 = vmatpush.bf16.xpose.msra.mxu0 0
        %1029 = vmatpush.bf16.xpose.msra.mxu0 0
        %1030 = vmatpush.bf16.xpose.msra.mxu0 0
        %1031 = vmatpush.bf16.xpose.msra.mxu0 0
        %1032 = vmatpush.bf16.xpose.msra.mxu0 %v1023
        %1033 = vmatmul.bf16.gmra.mxu0 %v1020
        %v1034 = vpop.f32.mrf.mxu0
        %v1035 = vadd.f32 0.0, %v1034
        %v1036 = vpop.f32.mrf.mxu0
        %1037 = vdwg.mxu0
        %v1038 = vsel %vm872, -1e+30, %v1011
        %v1039 = vsel %vm872, -1e+30, %v1035
        %v1040 = vsel %vm827, %v1038, -inf
        %1041 = vmax.xlane.f32.xlu0 %v1040
        %v1042 = vpop.xlane.xlu0 %1041
        %v1043 = vsel %vm827, %v1039, -inf
        %1044 = vmax.xlane.f32.xlu0 %v1043
        %v1045 = vpop.xlane.xlu0 %1044
        %v1046 = vsub.f32 %v1038, %v1042
        %v1047 = vsub.f32 %v1039, %v1045
        %v1048 = vmul.f32 %v1046, 1.442695
        %v1049 = vpow.pop %v1048
        %v1050 = vmul.f32 %v1047, 1.442695
        %v1051 = vpow.pop %v1050
        %v1052 = vsel %vm827, %v1049, 0.0
        %1053 = vadd.xlane.f32.xlu0 %v1052
        %v1054 = vpop.xlane.xlu0 %1053
        %v1055 = vsel %vm827, %v1051, 0.0
        %1056 = vadd.xlane.f32.xlu0 %v1055
        %v1057 = vpop.xlane.xlu0 %1056
        %v1058 = vpack.c.bf16 %v1049, %v1049
        %v1059 = vpack.c.bf16 %v1051, %v1051
        %1060 = vrot.lane.b32.xlu0 %v992, 112
        %v1061 = vpop.permute.xlu0 %1060
        %v1063 = vsel %vm827, %v1058, 0
        %v1066 = vsel %vm900, %v1061, 0
        %1068 = vmatpush.bf16.msra.mxu0 0
        %1069 = vmatpush.bf16.msra.mxu0 0
        %1070 = vmatpush.bf16.msra.mxu0 0
        %1071 = vmatpush.bf16.msra.mxu0 0
        %1072 = vmatpush.bf16.msra.mxu0 0
        %1073 = vmatpush.bf16.msra.mxu0 0
        %1074 = vmatpush.bf16.msra.mxu0 0
        %1075 = vmatpush.bf16.msra.mxu0 %v1066
        %1076 = vmatmul.bf16.gmra.mxu0 %v1063
        %v1077 = vpop.f32.mrf.mxu0
        %v1078 = vadd.f32 0.0, %v1077
        %v1079 = vpop.f32.mrf.mxu0
        %1080 = vdwg.mxu0
        %1081 = vrot.lane.b32.xlu0 %v1016, 112
        %v1082 = vpop.permute.xlu0 %1081
        %v1084 = vsel %vm827, %v1059, 0
        %v1087 = vsel %vm900, %v1082, 0
        %1089 = vmatpush.bf16.msra.mxu0 0
        %1090 = vmatpush.bf16.msra.mxu0 0
        %1091 = vmatpush.bf16.msra.mxu0 0
        %1092 = vmatpush.bf16.msra.mxu0 0
        %1093 = vmatpush.bf16.msra.mxu0 0
        %1094 = vmatpush.bf16.msra.mxu0 0
        %1095 = vmatpush.bf16.msra.mxu0 0
        %1096 = vmatpush.bf16.msra.mxu0 %v1087
        %1097 = vmatmul.bf16.gmra.mxu0 %v1084
        %v1098 = vpop.f32.mrf.mxu0
        %v1099 = vadd.f32 0.0, %v1098
        %v1100 = vpop.f32.mrf.mxu0
        %1101 = vdwg.mxu0
        %v1102 = vrcp.pop %v1054
        %v1103 = vrcp.pop %v1057
        %v1104 = vmul.f32 %v1078, %v1102
        %v1105 = vmul.f32 %v1099, %v1103
        %v1106 = vpack.c.bf16 %v1104, %v1104
        %v1107 = vpack.c.bf16 %v1105, %v1105
        %1110 = vrot.lane.b32.xlu0 %v1106, 8
        %v1111 = vpop.permute.xlu0 %1110
        %1112 = vrot.lane.b32.xlu0 %v1107, 8
        %v1113 = vpop.permute.xlu0 %1112
        %vm1116 = vcmask 126016
        %1117 = vst.msk [vmem:[#allocation3] sm:$0xf] %vm1116, %v1111
        %1118 = vst.msk [vmem:[#allocation3 + $0x4] sm:$0xf] %vm1116, %v1113
        %v1119 = vld [vmem:[%s658] sm:$0xf]
        %v1120 = vld [vmem:[%s658 + $0x4] sm:$0xf]
        %v1121 = vld [vmem:[%s658 + $0x8] sm:$0xf]
        %v1122 = vld [vmem:[%s658 + $0xc] sm:$0xf]
        %v1127 = vunpack.c.l.b16 %v1119
        %v1128 = vunpack.c.l.b16 %v1120
        %v1129 = vunpack.c.l.b16 %v1121
        %v1130 = vunpack.c.l.b16 %v1122
        %v1131 = vpack.c.b16 %v1128, %v1127
        %v1132 = vpack.c.b16 %v1130, %v1129
        %1133 = vrot.lane.b32.xlu0 %v1131, 80
        %v1134 = vpop.permute.xlu0 %1133
        %1135 = vrot.lane.b32.xlu0 %v1132, 80
        %v1136 = vpop.permute.xlu0 %1135
        %1139 = vrot.lane.b32.xlu0 %v785, 80
        %v1140 = vpop.permute.xlu0 %1139
        %1142 = vmatpush.bf16.msra.mxu0 0
        %1143 = vmatpush.bf16.msra.mxu0 0
        %1144 = vmatpush.bf16.msra.mxu0 0
        %1145 = vmatpush.bf16.msra.mxu0 0
        %1146 = vmatpush.bf16.msra.mxu0 0
        %1147 = vmatpush.bf16.msra.mxu0 0
        %1148 = vmatpush.bf16.msra.mxu0 %v1136
        %1149 = vmatpush.bf16.msra.mxu0 %v1134
        %1150 = vmatmul.bf16.gmra.mxu0 %v800
        %v1151 = vpop.f32.mrf.mxu0
        %v1152 = vadd.f32 %v1140, %v1151
        %v1153 = vpop.f32.mrf.mxu0
        %v1154 = vadd.f32 %v1140, %v1153
        %1155 = vdwg.mxu0
        %v1156 = vmul.f32 %v1152, 0.35355338
        %v1157 = vmul.f32 %v1154, 0.35355338
        %v1158 = vpack.c.bf16 %v1156, %v1156
        %v1159 = vpack.c.bf16 %v1157, %v1157
        %v1160 = vpack.c.bf16 %v1152, %v1152
        %v1161 = vpack.c.bf16 %v1154, %v1154
        %v1163 = vunpack.c.l.b16 %v1160
        %v1164 = vpack.c.b16 %v1163, %v1163
        %1165 = vrot.lane.b32.xlu0 %v1164, 120
        %v1166 = vpop.permute.xlu0 %1165
        %v1168 = vsel %vm827, %v1158, 0
        %v1171 = vsel %vm827, %v1166, 0
        %1173 = vmatpush.bf16.xpose.msra.mxu0 0
        %1174 = vmatpush.bf16.xpose.msra.mxu0 0
        %1175 = vmatpush.bf16.xpose.msra.mxu0 0
        %1176 = vmatpush.bf16.xpose.msra.mxu0 0
        %1177 = vmatpush.bf16.xpose.msra.mxu0 0
        %1178 = vmatpush.bf16.xpose.msra.mxu0 0
        %1179 = vmatpush.bf16.xpose.msra.mxu0 0
        %1180 = vmatpush.bf16.xpose.msra.mxu0 %v1171
        %1181 = vmatmul.bf16.gmra.mxu0 %v1168
        %v1182 = vpop.f32.mrf.mxu0
        %v1183 = vadd.f32 0.0, %v1182
        %v1184 = vpop.f32.mrf.mxu0
        %1185 = vdwg.mxu0
        %v1187 = vunpack.c.l.b16 %v1161
        %v1188 = vpack.c.b16 %v1187, %v1187
        %1189 = vrot.lane.b32.xlu0 %v1188, 120
        %v1190 = vpop.permute.xlu0 %1189
        %v1192 = vsel %vm827, %v1159, 0
        %v1195 = vsel %vm827, %v1190, 0
        %1197 = vmatpush.bf16.xpose.msra.mxu0 0
        %1198 = vmatpush.bf16.xpose.msra.mxu0 0
        %1199 = vmatpush.bf16.xpose.msra.mxu0 0
        %1200 = vmatpush.bf16.xpose.msra.mxu0 0
        %1201 = vmatpush.bf16.xpose.msra.mxu0 0
        %1202 = vmatpush.bf16.xpose.msra.mxu0 0
        %1203 = vmatpush.bf16.xpose.msra.mxu0 0
        %1204 = vmatpush.bf16.xpose.msra.mxu0 %v1195
        %1205 = vmatmul.bf16.gmra.mxu0 %v1192
        %v1206 = vpop.f32.mrf.mxu0
        %v1207 = vadd.f32 0.0, %v1206
        %v1208 = vpop.f32.mrf.mxu0
        %1209 = vdwg.mxu0
        %v1210 = vsel %vm872, -1e+30, %v1183
        %v1211 = vsel %vm872, -1e+30, %v1207
        %v1212 = vsel %vm827, %v1210, -inf
        %1213 = vmax.xlane.f32.xlu0 %v1212
        %v1214 = vpop.xlane.xlu0 %1213
        %v1215 = vsel %vm827, %v1211, -inf
        %1216 = vmax.xlane.f32.xlu0 %v1215
        %v1217 = vpop.xlane.xlu0 %1216
        %v1218 = vsub.f32 %v1210, %v1214
        %v1219 = vsub.f32 %v1211, %v1217
        %v1220 = vmul.f32 %v1218, 1.442695
        %v1221 = vpow.pop %v1220
        %v1222 = vmul.f32 %v1219, 1.442695
        %v1223 = vpow.pop %v1222
        %v1224 = vsel %vm827, %v1221, 0.0
        %1225 = vadd.xlane.f32.xlu0 %v1224
        %v1226 = vpop.xlane.xlu0 %1225
        %v1227 = vsel %vm827, %v1223, 0.0
        %1228 = vadd.xlane.f32.xlu0 %v1227
        %v1229 = vpop.xlane.xlu0 %1228
        %v1230 = vpack.c.bf16 %v1221, %v1221
        %v1231 = vpack.c.bf16 %v1223, %v1223
        %1232 = vrot.lane.b32.xlu0 %v1164, 112
        %v1233 = vpop.permute.xlu0 %1232
        %v1235 = vsel %vm827, %v1230, 0
        %v1238 = vsel %vm900, %v1233, 0
        %1240 = vmatpush.bf16.msra.mxu0 0
        %1241 = vmatpush.bf16.msra.mxu0 0
        %1242 = vmatpush.bf16.msra.mxu0 0
        %1243 = vmatpush.bf16.msra.mxu0 0
        %1244 = vmatpush.bf16.msra.mxu0 0
        %1245 = vmatpush.bf16.msra.mxu0 0
        %1246 = vmatpush.bf16.msra.mxu0 0
        %1247 = vmatpush.bf16.msra.mxu0 %v1238
        %1248 = vmatmul.bf16.gmra.mxu0 %v1235
        %v1249 = vpop.f32.mrf.mxu0
        %v1250 = vadd.f32 0.0, %v1249
        %v1251 = vpop.f32.mrf.mxu0
        %1252 = vdwg.mxu0
        %1253 = vrot.lane.b32.xlu0 %v1188, 112
        %v1254 = vpop.permute.xlu0 %1253
        %v1256 = vsel %vm827, %v1231, 0
        %v1259 = vsel %vm900, %v1254, 0
        %1261 = vmatpush.bf16.msra.mxu0 0
        %1262 = vmatpush.bf16.msra.mxu0 0
        %1263 = vmatpush.bf16.msra.mxu0 0
        %1264 = vmatpush.bf16.msra.mxu0 0
        %1265 = vmatpush.bf16.msra.mxu0 0
        %1266 = vmatpush.bf16.msra.mxu0 0
        %1267 = vmatpush.bf16.msra.mxu0 0
        %1268 = vmatpush.bf16.msra.mxu0 %v1259
        %1269 = vmatmul.bf16.gmra.mxu0 %v1256
        %v1270 = vpop.f32.mrf.mxu0
        %v1271 = vadd.f32 0.0, %v1270
        %v1272 = vpop.f32.mrf.mxu0
        %1273 = vdwg.mxu0
        %v1274 = vrcp.pop %v1226
        %v1275 = vrcp.pop %v1229
        %v1276 = vmul.f32 %v1250, %v1274
        %v1277 = vmul.f32 %v1271, %v1275
        %v1278 = vpack.c.bf16 %v1276, %v1276
        %v1279 = vpack.c.bf16 %v1277, %v1277
        %1282 = vrot.lane.b32.xlu0 %v1278, 16
        %v1283 = vpop.permute.xlu0 %1282
        %1284 = vrot.lane.b32.xlu0 %v1279, 16
        %v1285 = vpop.permute.xlu0 %1284
        %vm1288 = vcmask 191616
        %1289 = vst.msk [vmem:[#allocation3] sm:$0xf] %vm1288, %v1283
        %1290 = vst.msk [vmem:[#allocation3 + $0x4] sm:$0xf] %vm1288, %v1285
        %v1291 = vld [vmem:[%s658] sm:$0xf]
        %v1292 = vld [vmem:[%s658 + $0x4] sm:$0xf]
        %v1293 = vld [vmem:[%s658 + $0x8] sm:$0xf]
        %v1294 = vld [vmem:[%s658 + $0xc] sm:$0xf]
        %v1299 = vunpack.c.l.b16 %v1291
        %v1300 = vunpack.c.l.b16 %v1292
        %v1301 = vunpack.c.l.b16 %v1293
        %v1302 = vunpack.c.l.b16 %v1294
        %v1303 = vpack.c.b16 %v1300, %v1299
        %v1304 = vpack.c.b16 %v1302, %v1301
        %1305 = vrot.lane.b32.xlu0 %v1303, 56
        %v1306 = vpop.permute.xlu0 %1305
        %1307 = vrot.lane.b32.xlu0 %v1304, 56
        %v1308 = vpop.permute.xlu0 %1307
        %1311 = vrot.lane.b32.xlu0 %v785, 56
        %v1312 = vpop.permute.xlu0 %1311
        %1314 = vmatpush.bf16.msra.mxu0 0
        %1315 = vmatpush.bf16.msra.mxu0 0
        %1316 = vmatpush.bf16.msra.mxu0 0
        %1317 = vmatpush.bf16.msra.mxu0 0
        %1318 = vmatpush.bf16.msra.mxu0 0
        %1319 = vmatpush.bf16.msra.mxu0 0
        %1320 = vmatpush.bf16.msra.mxu0 %v1308
        %1321 = vmatpush.bf16.msra.mxu0 %v1306
        %1322 = vmatmul.bf16.gmra.mxu0 %v800
        %v1323 = vpop.f32.mrf.mxu0
        %v1324 = vadd.f32 %v1312, %v1323
        %v1325 = vpop.f32.mrf.mxu0
        %v1326 = vadd.f32 %v1312, %v1325
        %1327 = vdwg.mxu0
        %v1328 = vmul.f32 %v1324, 0.35355338
        %v1329 = vmul.f32 %v1326, 0.35355338
        %v1330 = vpack.c.bf16 %v1328, %v1328
        %v1331 = vpack.c.bf16 %v1329, %v1329
        %v1332 = vpack.c.bf16 %v1324, %v1324
        %v1333 = vpack.c.bf16 %v1326, %v1326
        %v1335 = vunpack.c.l.b16 %v1332
        %v1336 = vpack.c.b16 %v1335, %v1335
        %1337 = vrot.lane.b32.xlu0 %v1336, 120
        %v1338 = vpop.permute.xlu0 %1337
        %v1340 = vsel %vm827, %v1330, 0
        %v1343 = vsel %vm827, %v1338, 0
        %1345 = vmatpush.bf16.xpose.msra.mxu0 0
        %1346 = vmatpush.bf16.xpose.msra.mxu0 0
        %1347 = vmatpush.bf16.xpose.msra.mxu0 0
        %1348 = vmatpush.bf16.xpose.msra.mxu0 0
        %1349 = vmatpush.bf16.xpose.msra.mxu0 0
        %1350 = vmatpush.bf16.xpose.msra.mxu0 0
        %1351 = vmatpush.bf16.xpose.msra.mxu0 0
        %1352 = vmatpush.bf16.xpose.msra.mxu0 %v1343
        %1353 = vmatmul.bf16.gmra.mxu0 %v1340
        %v1354 = vpop.f32.mrf.mxu0
        %v1355 = vadd.f32 0.0, %v1354
        %v1356 = vpop.f32.mrf.mxu0
        %1357 = vdwg.mxu0
        %v1359 = vunpack.c.l.b16 %v1333
        %v1360 = vpack.c.b16 %v1359, %v1359
        %1361 = vrot.lane.b32.xlu0 %v1360, 120
        %v1362 = vpop.permute.xlu0 %1361
        %v1364 = vsel %vm827, %v1331, 0
        %v1367 = vsel %vm827, %v1362, 0
        %1369 = vmatpush.bf16.xpose.msra.mxu0 0
        %1370 = vmatpush.bf16.xpose.msra.mxu0 0
        %1371 = vmatpush.bf16.xpose.msra.mxu0 0
        %1372 = vmatpush.bf16.xpose.msra.mxu0 0
        %1373 = vmatpush.bf16.xpose.msra.mxu0 0
        %1374 = vmatpush.bf16.xpose.msra.mxu0 0
        %1375 = vmatpush.bf16.xpose.msra.mxu0 0
        %1376 = vmatpush.bf16.xpose.msra.mxu0 %v1367
        %1377 = vmatmul.bf16.gmra.mxu0 %v1364
        %v1378 = vpop.f32.mrf.mxu0
        %v1379 = vadd.f32 0.0, %v1378
        %v1380 = vpop.f32.mrf.mxu0
        %1381 = vdwg.mxu0
        %v1382 = vsel %vm872, -1e+30, %v1355
        %v1383 = vsel %vm872, -1e+30, %v1379
        %v1384 = vsel %vm827, %v1382, -inf
        %1385 = vmax.xlane.f32.xlu0 %v1384
        %v1386 = vpop.xlane.xlu0 %1385
        %v1387 = vsel %vm827, %v1383, -inf
        %1388 = vmax.xlane.f32.xlu0 %v1387
        %v1389 = vpop.xlane.xlu0 %1388
        %v1390 = vsub.f32 %v1382, %v1386
        %v1391 = vsub.f32 %v1383, %v1389
        %v1392 = vmul.f32 %v1390, 1.442695
        %v1393 = vpow.pop %v1392
        %v1394 = vmul.f32 %v1391, 1.442695
        %v1395 = vpow.pop %v1394
        %v1396 = vsel %vm827, %v1393, 0.0
        %1397 = vadd.xlane.f32.xlu0 %v1396
        %v1398 = vpop.xlane.xlu0 %1397
        %v1399 = vsel %vm827, %v1395, 0.0
        %1400 = vadd.xlane.f32.xlu0 %v1399
        %v1401 = vpop.xlane.xlu0 %1400
        %v1402 = vpack.c.bf16 %v1393, %v1393
        %v1403 = vpack.c.bf16 %v1395, %v1395
        %1404 = vrot.lane.b32.xlu0 %v1336, 112
        %v1405 = vpop.permute.xlu0 %1404
        %v1407 = vsel %vm827, %v1402, 0
        %v1410 = vsel %vm900, %v1405, 0
        %1412 = vmatpush.bf16.msra.mxu0 0
        %1413 = vmatpush.bf16.msra.mxu0 0
        %1414 = vmatpush.bf16.msra.mxu0 0
        %1415 = vmatpush.bf16.msra.mxu0 0
        %1416 = vmatpush.bf16.msra.mxu0 0
        %1417 = vmatpush.bf16.msra.mxu0 0
        %1418 = vmatpush.bf16.msra.mxu0 0
        %1419 = vmatpush.bf16.msra.mxu0 %v1410
        %1420 = vmatmul.bf16.gmra.mxu0 %v1407
        %v1421 = vpop.f32.mrf.mxu0
        %v1422 = vadd.f32 0.0, %v1421
        %v1423 = vpop.f32.mrf.mxu0
        %1424 = vdwg.mxu0
        %1425 = vrot.lane.b32.xlu0 %v1360, 112
        %v1426 = vpop.permute.xlu0 %1425
        %v1428 = vsel %vm827, %v1403, 0
        %v1431 = vsel %vm900, %v1426, 0
        %1433 = vmatpush.bf16.msra.mxu0 0
        %1434 = vmatpush.bf16.msra.mxu0 0
        %1435 = vmatpush.bf16.msra.mxu0 0
        %1436 = vmatpush.bf16.msra.mxu0 0
        %1437 = vmatpush.bf16.msra.mxu0 0
        %1438 = vmatpush.bf16.msra.mxu0 0
        %1439 = vmatpush.bf16.msra.mxu0 0
        %1440 = vmatpush.bf16.msra.mxu0 %v1431
        %1441 = vmatmul.bf16.gmra.mxu0 %v1428
        %v1442 = vpop.f32.mrf.mxu0
        %v1443 = vadd.f32 0.0, %v1442
        %v1444 = vpop.f32.mrf.mxu0
        %1445 = vdwg.mxu0
        %v1446 = vrcp.pop %v1398
        %v1447 = vrcp.pop %v1401
        %v1448 = vmul.f32 %v1422, %v1446
        %v1449 = vmul.f32 %v1443, %v1447
        %v1450 = vpack.c.bf16 %v1448, %v1448
        %v1451 = vpack.c.bf16 %v1449, %v1449
        %1454 = vrot.lane.b32.xlu0 %v1450, 24
        %v1455 = vpop.permute.xlu0 %1454
        %1456 = vrot.lane.b32.xlu0 %v1451, 24
        %v1457 = vpop.permute.xlu0 %1456
        %vm1460 = vcmask 257216
        %1461 = vst.msk [vmem:[#allocation3] sm:$0xf] %vm1460, %v1455
        %1462 = vst.msk [vmem:[#allocation3 + $0x4] sm:$0xf] %vm1460, %v1457
        %v1463 = vld [vmem:[#allocation3] sm:$0xf]
        %v1464 = vld [vmem:[#allocation3 + $0x4] sm:$0xf]
        %v1465 = vld [vmem:[%s666] sm:$0xf]
        %v1466 = vld [vmem:[%s666 + $0x4] sm:$0xf]
        %v1467 = vld [vmem:[%s666 + $0x8] sm:$0xf]
        %v1468 = vld [vmem:[%s666 + $0xc] sm:$0xf]
        %v1469 = vld [vmem:[%s669] sm:$0x1]
        %v1471 = vperm.slane %v1469, 0
        %v1475 = vunpack.c.l.b16 %v1463
        %v1476 = vunpack.c.l.b16 %v1464
        %v1477 = vpack.c.b16 %v1476, %v1475
        %v1482 = vunpack.c.l.b16 %v1465
        %v1483 = vunpack.c.l.b16 %v1466
        %v1484 = vunpack.c.l.b16 %v1467
        %v1485 = vunpack.c.l.b16 %v1468
        %v1486 = vpack.c.b16 %v1483, %v1482
        %v1487 = vpack.c.b16 %v1485, %v1484
        %v1491 = vsel %vm712, %v1477, 0
        %1493 = vmatpush.bf16.msra.mxu0 0
        %1494 = vmatpush.bf16.msra.mxu0 0
        %1495 = vmatpush.bf16.msra.mxu0 0
        %1496 = vmatpush.bf16.msra.mxu0 0
        %1497 = vmatpush.bf16.msra.mxu0 0
        %1498 = vmatpush.bf16.msra.mxu0 0
        %1499 = vmatpush.bf16.msra.mxu0 %v1487
        %1500 = vmatpush.bf16.msra.mxu0 %v1486
        %1501 = vmatmul.bf16.gmra.mxu0 %v1491
        %v1502 = vpop.f32.mrf.mxu0
        %v1503 = vadd.f32 %v1471, %v1502
        %v1504 = vpop.f32.mrf.mxu0
        %v1505 = vadd.f32 %v1471, %v1504
        %1506 = vdwg.mxu0
        %v1507 = vadd.f32 %v703, %v1503
        %v1508 = vadd.f32 %v704, %v1505
        %v1509 = vld [vmem:[%s672] sm:$0x1]
        %v1510 = vld [vmem:[%s675] sm:$0x1]
        %v1511 = vsel %vm712, %v1507, 0.0
        %1512 = vadd.xlane.f32.xlu0 %v1511
        %v1513 = vpop.xlane.xlu0 %1512
        %v1514 = vsel %vm712, %v1508, 0.0
        %1515 = vadd.xlane.f32.xlu0 %v1514
        %v1516 = vpop.xlane.xlu0 %1515
        %v1517 = vmul.f32 %v1513, %v725
        %v1518 = vmul.f32 %v1516, %v725
        %v1519 = vmul.f32 %v1507, %v1507
        %v1520 = vmul.f32 %v1508, %v1508
        %v1521 = vsel %vm712, %v1519, 0.0
        %1522 = vadd.xlane.f32.xlu0 %v1521
        %v1523 = vpop.xlane.xlu0 %1522
        %v1524 = vsel %vm712, %v1520, 0.0
        %1525 = vadd.xlane.f32.xlu0 %v1524
        %v1526 = vpop.xlane.xlu0 %1525
        %v1527 = vmul.f32 %v1523, %v725
        %v1528 = vmul.f32 %v1526, %v725
        %v1529 = vmul.f32 %v1517, %v1517
        %v1530 = vmul.f32 %v1518, %v1518
        %v1531 = vsub.f32 %v1527, %v1529
        %v1532 = vsub.f32 %v1528, %v1530
        %v1533 = vsub.f32 %v1507, %v1517
        %v1534 = vsub.f32 %v1508, %v1518
        %v1535 = vadd.f32 %v1531, 1e-05
        %v1536 = vadd.f32 %v1532, 1e-05
        %v1537 = vrsqrt.pop %v1535
        %v1538 = vmul.f32 %v1537, %v1535
        %v1539 = vmul.f32 %v1538, %v1537
        %v1540 = vmul.f32 0.5, %v1539
        %v1541 = vsub.f32 1.5, %v1540
        %v1542 = vmul.f32 %v1537, %v1541
        %vm1543 = vweird.f32 %v1535
        %vm1544 = vweird.f32 %v1537
        %vm1545 = vmor %vm1543, %vm1544
        %v1546 = vsel %vm1545, %v1537, %v1542
        %v1547 = vrsqrt.pop %v1536
        %v1548 = vmul.f32 %v1547, %v1536
        %v1549 = vmul.f32 %v1548, %v1547
        %v1550 = vmul.f32 0.5, %v1549
        %v1551 = vsub.f32 1.5, %v1550
        %v1552 = vmul.f32 %v1547, %v1551
        %vm1553 = vweird.f32 %v1536
        %vm1554 = vweird.f32 %v1547
        %vm1555 = vmor %vm1553, %vm1554
        %v1556 = vsel %vm1555, %v1547, %v1552
        %v1557 = vmul.f32 %v1533, %v1546
        %v1558 = vmul.f32 %v1534, %v1556
        %v1560 = vperm.slane %v1509, 0
        %v1562 = vmul.f32 %v1557, %v1560
        %v1563 = vmul.f32 %v1558, %v1560
        %v1565 = vperm.slane %v1510, 0
        %v1567 = vadd.f32 %v1562, %v1565
        %v1568 = vadd.f32 %v1563, %v1565
        %v1569 = vpack.c.bf16 %v1568, %v1567
        %v1570 = vld [vmem:[%s680] sm:$0xf]
        %v1571 = vld [vmem:[%s680 + $0x4] sm:$0xf]
        %v1572 = vld [vmem:[%s680 + $0x8] sm:$0xf]
        %v1573 = vld [vmem:[%s680 + $0xc] sm:$0xf]
        %v1574 = vld [vmem:[%s683] sm:$0x1]
        %v1576 = vperm.slane %v1574, 0
        %v1582 = vunpack.c.l.b16 %v1570
        %v1583 = vunpack.c.l.b16 %v1571
        %v1584 = vunpack.c.l.b16 %v1572
        %v1585 = vunpack.c.l.b16 %v1573
        %v1586 = vpack.c.b16 %v1583, %v1582
        %v1587 = vpack.c.b16 %v1585, %v1584
        %v1591 = vsel %vm712, %v1569, 0
        %1593 = vmatpush.bf16.msra.mxu0 0
        %1594 = vmatpush.bf16.msra.mxu0 0
        %1595 = vmatpush.bf16.msra.mxu0 0
        %1596 = vmatpush.bf16.msra.mxu0 0
        %1597 = vmatpush.bf16.msra.mxu0 0
        %1598 = vmatpush.bf16.msra.mxu0 0
        %1599 = vmatpush.bf16.msra.mxu0 %v1587
        %1600 = vmatpush.bf16.msra.mxu0 %v1586
        %1601 = vmatmul.bf16.gmra.mxu0 %v1591
        %v1602 = vpop.f32.mrf.mxu0
        %v1603 = vadd.f32 %v1576, %v1602
        %v1604 = vpop.f32.mrf.mxu0
        %v1605 = vadd.f32 %v1576, %v1604
        %1606 = vdwg.mxu0
        %v1607 = vmul.f32 %v1603, 0.5
        %v1608 = vmul.f32 %v1605, 0.5
        %v1609 = vmul.f32 %v1603, 0.044715
        %v1610 = vmul.f32 %v1605, 0.044715
        %v1611 = vmul.f32 %v1609, %v1603
        %v1612 = vmul.f32 %v1610, %v1605
        %v1613 = vmul.f32 %v1611, %v1603
        %v1614 = vmul.f32 %v1612, %v1605
        %v1615 = vadd.f32 %v1603, %v1613
        %v1616 = vadd.f32 %v1605, %v1614
        %v1617 = vmul.f32 %v1615, 0.7978846
        %v1618 = vmul.f32 %v1616, 0.7978846
        %v1619 = vtanh.pop %v1617
        %v1620 = vtanh.pop %v1618
        %v1621 = vadd.f32 %v1619, 1.0
        %v1622 = vadd.f32 %v1620, 1.0
        %v1623 = vmul.f32 %v1607, %v1621
        %v1624 = vmul.f32 %v1608, %v1622
        %v1625 = vpack.c.bf16 %v1624, %v1623
        %v1626 = vld [vmem:[%s688] sm:$0xf]
        %v1627 = vld [vmem:[%s688 + $0x4] sm:$0xf]
        %v1628 = vld [vmem:[%s688 + $0x8] sm:$0xf]
        %v1629 = vld [vmem:[%s688 + $0xc] sm:$0xf]
        %v1630 = vld [vmem:[%s688 + $0x10] sm:$0xf]
        %v1631 = vld [vmem:[%s688 + $0x14] sm:$0xf]
        %v1632 = vld [vmem:[%s688 + $0x18] sm:$0xf]
        %v1633 = vld [vmem:[%s688 + $0x1c] sm:$0xf]
        %v1634 = vld [vmem:[%s688 + $0x20] sm:$0xf]
        %v1635 = vld [vmem:[%s688 + $0x24] sm:$0xf]
        %v1636 = vld [vmem:[%s688 + $0x28] sm:$0xf]
        %v1637 = vld [vmem:[%s688 + $0x2c] sm:$0xf]
        %v1638 = vld [vmem:[%s688 + $0x30] sm:$0xf]
        %v1639 = vld [vmem:[%s688 + $0x34] sm:$0xf]
        %v1640 = vld [vmem:[%s688 + $0x38] sm:$0xf]
        %v1641 = vld [vmem:[%s688 + $0x3c] sm:$0xf]
        %v1642 = vld [vmem:[%s691] sm:$0x1]
        %v1644 = vperm.slane %v1642, 0
        %v1662 = vunpack.c.l.b16 %v1626
        %v1663 = vunpack.c.l.b16 %v1627
        %v1664 = vunpack.c.l.b16 %v1628
        %v1665 = vunpack.c.l.b16 %v1629
        %v1666 = vunpack.c.l.b16 %v1630
        %v1667 = vunpack.c.l.b16 %v1631
        %v1668 = vunpack.c.l.b16 %v1632
        %v1669 = vunpack.c.l.b16 %v1633
        %v1670 = vunpack.c.l.b16 %v1634
        %v1671 = vunpack.c.l.b16 %v1635
        %v1672 = vunpack.c.l.b16 %v1636
        %v1673 = vunpack.c.l.b16 %v1637
        %v1674 = vunpack.c.l.b16 %v1638
        %v1675 = vunpack.c.l.b16 %v1639
        %v1676 = vunpack.c.l.b16 %v1640
        %v1677 = vunpack.c.l.b16 %v1641
        %v1678 = vpack.c.b16 %v1663, %v1662
        %v1679 = vpack.c.b16 %v1665, %v1664
        %v1680 = vpack.c.b16 %v1667, %v1666
        %v1681 = vpack.c.b16 %v1669, %v1668
        %v1682 = vpack.c.b16 %v1671, %v1670
        %v1683 = vpack.c.b16 %v1673, %v1672
        %v1684 = vpack.c.b16 %v1675, %v1674
        %v1685 = vpack.c.b16 %v1677, %v1676
        %1694 = vmatpush.bf16.msra.mxu0 %v1685
        %1695 = vmatpush.bf16.msra.mxu0 %v1684
        %1696 = vmatpush.bf16.msra.mxu0 %v1683
        %1697 = vmatpush.bf16.msra.mxu0 %v1682
        %1698 = vmatpush.bf16.msra.mxu0 %v1681
        %1699 = vmatpush.bf16.msra.mxu0 %v1680
        %1700 = vmatpush.bf16.msra.mxu0 %v1679
        %1701 = vmatpush.bf16.msra.mxu0 %v1678
        %1702 = vmatmul.bf16.gmra.mxu0 %v1625
        %v1703 = vpop.f32.mrf.mxu0
        %v1704 = vadd.f32 %v1644, %v1703
        %v1705 = vpop.f32.mrf.mxu0
        %v1706 = vadd.f32 %v1644, %v1705
        %1707 = vdwg.mxu0
        %v1708 = vadd.f32 %v1507, %v1704
        %v1709 = vadd.f32 %v1508, %v1706
        %p1710 = scmp.lt.s32.totalorder %s32, 1
        // Predicated region
        $region85: #{tpu_custom_call.1} parent=79 // pred_check
          %p1711 = pneg %p1710
        $region86: #{tpu_custom_call.1} parent=79 // pred_check_branch
          %1713 = sbr.rel (%p1711) target = $region88
        $region87: #{tpu_custom_call.1} parent=79 // pred_region
          %1714 = vst.msk [vmem:[#allocation2] sm:$0xff] %vm712, %v1708
          %1715 = vst.msk [vmem:[#allocation2 + $0x8] sm:$0xff] %vm712, %v1709
        $region88: #{tpu_custom_call.1} parent=79 // pred_fallthru
          _
        %p1716 = scmp.eq.s32.totalorder %s32, 1
        // Predicated region
        $region89: #{tpu_custom_call.1} parent=79 // pred_check
          %p1717 = pneg %p1716
        $region90: #{tpu_custom_call.1} parent=79 // pred_check_branch
          %1719 = sbr.rel (%p1717) target = $region92
        $region91: #{tpu_custom_call.1} parent=79 // pred_region
          %v1720 = vld [vmem:[%s13] sm:$0x1]
          %v1721 = vld [vmem:[%s14] sm:$0x1]
          %v1722 = vsel %vm712, %v1708, 0.0
          %1723 = vadd.xlane.f32.xlu0 %v1722
          %v1724 = vpop.xlane.xlu0 %1723
          %v1725 = vsel %vm712, %v1709, 0.0
          %1726 = vadd.xlane.f32.xlu0 %v1725
          %v1727 = vpop.xlane.xlu0 %1726
          %v1728 = vmul.f32 %v1724, %v725
          %v1729 = vmul.f32 %v1727, %v725
          %v1730 = vmul.f32 %v1708, %v1708
          %v1731 = vmul.f32 %v1709, %v1709
          %v1732 = vsel %vm712, %v1730, 0.0
          %1733 = vadd.xlane.f32.xlu0 %v1732
          %v1734 = vpop.xlane.xlu0 %1733
          %v1735 = vsel %vm712, %v1731, 0.0
          %1736 = vadd.xlane.f32.xlu0 %v1735
          %v1737 = vpop.xlane.xlu0 %1736
          %v1738 = vmul.f32 %v1734, %v725
          %v1739 = vmul.f32 %v1737, %v725
          %v1740 = vmul.f32 %v1728, %v1728
          %v1741 = vmul.f32 %v1729, %v1729
          %v1742 = vsub.f32 %v1738, %v1740
          %v1743 = vsub.f32 %v1739, %v1741
          %v1744 = vsub.f32 %v1708, %v1728
          %v1745 = vsub.f32 %v1709, %v1729
          %v1746 = vadd.f32 %v1742, 1e-05
          %v1747 = vadd.f32 %v1743, 1e-05
          %v1748 = vrsqrt.pop %v1746
          %v1749 = vmul.f32 %v1748, %v1746
          %v1750 = vmul.f32 %v1749, %v1748
          %v1751 = vmul.f32 0.5, %v1750
          %v1752 = vsub.f32 1.5, %v1751
          %v1753 = vmul.f32 %v1748, %v1752
          %vm1754 = vweird.f32 %v1746
          %vm1755 = vweird.f32 %v1748
          %vm1756 = vmor %vm1754, %vm1755
          %v1757 = vsel %vm1756, %v1748, %v1753
          %v1758 = vrsqrt.pop %v1747
          %v1759 = vmul.f32 %v1758, %v1747
          %v1760 = vmul.f32 %v1759, %v1758
          %v1761 = vmul.f32 0.5, %v1760
          %v1762 = vsub.f32 1.5, %v1761
          %v1763 = vmul.f32 %v1758, %v1762
          %vm1764 = vweird.f32 %v1747
          %vm1765 = vweird.f32 %v1758
          %vm1766 = vmor %vm1764, %vm1765
          %v1767 = vsel %vm1766, %v1758, %v1763
          %v1768 = vmul.f32 %v1744, %v1757
          %v1769 = vmul.f32 %v1745, %v1767
          %v1771 = vperm.slane %v1720, 0
          %v1773 = vmul.f32 %v1768, %v1771
          %v1774 = vmul.f32 %v1769, %v1771
          %v1776 = vperm.slane %v1721, 0
          %v1778 = vadd.f32 %v1773, %v1776
          %v1779 = vadd.f32 %v1774, %v1776
          %v1780 = vpack.c.bf16 %v1778, %v1778
          %v1781 = vpack.c.bf16 %v1779, %v1779
          %vm1782 = vcmask 257024
          %1783 = vst.msk [vmem:[#allocation4] sm:$0xf] %vm1782, %v1780
          %1784 = vst.msk [vmem:[#allocation4 + $0x4] sm:$0xf] %vm1782, %v1781
        $region92: #{tpu_custom_call.1} parent=79 // pred_fallthru
          _
        // Predicated region
        $region93: #{tpu_custom_call.1} parent=79 // pred_check
          %p1785 = pneg %p437
        $region94: #{tpu_custom_call.1} parent=79 // pred_check_branch
          %1787 = sbr.rel (%p1785) target = $region96
        $region95: #{tpu_custom_call.1} parent=79 // pred_region
          %s1788 = smul.u32 2, %s31
          %1790 = vsyncadd [#allocation5], 0
          %s1791 = smul.addr %s1788, 4
          %s1792 = scalar_lea.hbm %s15, %s1791
          %s1793 = sshll.u32 [#allocation4], 4
          %s1794 = int_to_ptr.vmem [resolvable:$true] %s1793
          %s1795 = sshll.u32 %s1792, 4
          %s1796 = int_to_ptr.hbm [resolvable:$true] %s1795
          %1801 = dma.vmem_to_hbm [thread:$0]  %s1794, 128, %s1796, [#allocation5], 64, 64, 4
        $region96: #{tpu_custom_call.1} parent=79 // pred_fallthru
          _
        // Predicated region
        $region97: #{tpu_custom_call.1} parent=79 // pred_check
          %p1802 = pneg %p437
        $region98: #{tpu_custom_call.1} parent=79 // pred_check_branch
          %1804 = sbr.rel (%p1802) target = $region100
        $region99: #{tpu_custom_call.1} parent=79 // pred_region
          %1806 = dma.done [#allocation5], 128
        $region100: #{tpu_custom_call.1} parent=79 // pred_fallthru
          _
      $region80: #{tpu_custom_call.1} parent=5 // pred_fallthru
        _
      %p1807 = scmp.le.s32.totalorder 2, %s22
      // Predicated region
      $region101: #{tpu_custom_call.1} parent=5 // pred_check
        %p1808 = pneg %p1807
      $region102: #{tpu_custom_call.1} parent=5 // pred_check_branch
        %1810 = sbr.rel (%p1808) target = $region104
      $region103: #{tpu_custom_call.1} parent=5 // pred_region
        %s1811 = ssub.s32 %s22, 2
      $region104: #{tpu_custom_call.1} parent=5 // pred_fallthru
        _
    $region6: #{tpu_custom_call.1} parent=1 // loop_footer
      %s26 = sadd.s32 1, %s22
    $region7: #{tpu_custom_call.1} parent=1 // loop_footer_branch
      %21 = sbr.rel target = $region3
    $region8: #{tpu_custom_call.1} parent=1 // loop_exit
      _
    %1812 = vsyncpa [#allocation5], 1
    %s1813 = scalar_lea.sflag [#allocation5], 1
    %1814 = vsyncpa %s1813, 1

</llo_original>
